<compile_context>
chip_gen: v7x
topology: tpu7x:2x2x1
jax: 0.10.0
libtpu: 0.0.40
codegen_flags: <defaults>
</compile_context>

<pallas_src>
import functools

import jax
import jax.numpy as jnp
import numpy as np
from jax import lax
from jax.experimental import pallas as pl
from jax.experimental.pallas import tpu as pltpu

VMEM = pl.BlockSpec(memory_space=pltpu.MemorySpace.VMEM)


# ----------------------------------------------------------------------------
# Fused forward kernel: conv blocks + relu/pool/bn + fc1(+relu) + fc2.
# ----------------------------------------------------------------------------
def _fused_vgg_kernel(*refs, meta):
    B = meta["B"]
    K = meta["K"]
    pad = meta["pad"]
    blocks = meta["blocks"]            # [{"convs": [(cin, cout), ...], "L": L, "Lp": Lp}, ...]
    n_blocks = len(blocks)
    n_convs = sum(len(b["convs"]) for b in blocks)

    i = 0
    x_ref = refs[i]; i += 1
    conv_refs = refs[i:i + n_convs]; i += n_convs
    pool_refs = refs[i:i + n_blocks]; i += n_blocks
    bn_refs = refs[i:i + n_blocks]; i += n_blocks
    w1_ref, b1_ref, gfc_ref, w2_ref, b2_ref = refs[i:i + 5]; i += 5
    o_ref = refs[i]

    # Activation layout: (channels, B*L) -- h[c, b*L + l] == act[b, c, l].
    h = x_ref[...]                                     # (1, B*L0) float32
    conv_i = 0
    for j, blk in enumerate(blocks):
        L = blk["L"]
        Lp = blk["Lp"]
        BL = B * L
        # Position within each length-L batch segment, shape (1, B*L).
        lpos = lax.broadcasted_iota(jnp.int32, (1, L), 1)
        lmod = jnp.concatenate([lpos] * B, axis=1) if B > 1 else lpos

        for (cin, cout) in blk["convs"]:
            w_aug = conv_refs[conv_i][...]             # (cout, K*cin + 1); bias = last column
            conv_i += 1
            if pad > 0:
                zpad = jnp.zeros((cin, pad), jnp.float32)
                xp = jnp.concatenate([zpad, h, zpad], axis=1)     # (cin, BL + 2*pad)
            else:
                xp = h
            parts = []
            for k in range(K):
                d = k - pad
                sl = xp[:, k:k + BL]                   # x shifted by d; zeros at array ends
                if d != 0:
                    # re-create per-batch-segment 'same' zero padding
                    valid = (lmod >= -d) & (lmod < L - d)
                    sl = jnp.where(valid, sl, 0.0)
                parts.append(sl)
            parts.append(jnp.ones((1, BL), jnp.float32))          # ones row -> bias add on MXU
            s_aug = jnp.concatenate(parts, axis=0)                # (K*cin + 1, BL)
            h = jnp.dot(w_aug, s_aug, preferred_element_type=jnp.float32)   # (cout, BL)

        # ReLU -> MaxPool1d(2) -> BatchNorm1d (eval affine)
        c_out = blk["convs"][-1][1]
        h = jnp.maximum(h, 0.0)
        nxt = jnp.concatenate([h[:, 1:], jnp.zeros((c_out, 1), jnp.float32)], axis=1)
        m = jnp.maximum(h, nxt)                                    # pairwise max candidates
        h = jnp.dot(m, pool_refs[j][...],
                    preferred_element_type=jnp.float32)            # (c_out, B*Lp) compaction
        bn = bn_refs[j][...]                                       # (c_out, 2): [scale, shift]
        h = h * bn[:, 0:1] + bn[:, 1:2]

    # Flatten + fc1 (+ReLU) + fc2, computed batch-major.  Dropout = identity (eval).
    L3 = meta["L3"]
    H = meta["H"]
    acc = jnp.zeros((B, H), jnp.float32)
    for l in range(L3):
        # gather column l of every batch segment: a_l[c, b] = act3[b, c, l]
        a_l = jnp.dot(h, gfc_ref[l], preferred_element_type=jnp.float32)     # (C3, B)
        # (C3, B)^T @ (C3, H) -> (B, H), contracting dim 0 of both
        acc = acc + lax.dot_general(
            a_l, w1_ref[l],
            dimension_numbers=(((0,), (0,)), ((), ())),
            preferred_element_type=jnp.float32)
    h1 = jnp.maximum(acc + b1_ref[...], 0.0)                                 # (B, H)
    out = jnp.dot(h1, w2_ref[...], preferred_element_type=jnp.float32) + b2_ref[...]
    o_ref[...] = out                                                         # (B, out_shape)


# ----------------------------------------------------------------------------
# Parameters: PyTorch-layout init + one-time re-layout for the fused kernel.
# ----------------------------------------------------------------------------
def init_params(key, *, input_shape, out_shape, num_layers, kernel_size, channel_size):
    """Deterministic parameters in PyTorch layout (Conv1d / BatchNorm1d / Linear)."""
    pad = kernel_size // 2
    params = {"blocks": []}
    in_ch, out_ch = 1, channel_size
    num_features = input_shape
    num_blocks = 3
    for _ in range(num_blocks):
        convs = []
        for _ in range(num_layers):
            key, kw, kb = jax.random.split(key, 3)
            fan_in = in_ch * kernel_size
            w = jax.random.normal(kw, (out_ch, in_ch, kernel_size),
                                  jnp.float32) / jnp.sqrt(fan_in)
            b = jax.random.normal(kb, (out_ch,), jnp.float32) * 0.01
            convs.append((w, b))
            num_features = num_features + 2 * pad - (kernel_size - 1)
            in_ch = out_ch
        key, kg, kbt, km, kv = jax.random.split(key, 5)
        params["blocks"].append({
            "convs": convs,
            # mildly non-trivial running stats so the BN path is exercised
            "gamma": 1.0 + 0.1 * jax.random.normal(kg, (out_ch,), jnp.float32),
            "beta": 0.1 * jax.random.normal(kbt, (out_ch,), jnp.float32),
            "mean": 0.1 * jax.random.normal(km, (out_ch,), jnp.float32),
            "var": 1.0 + 0.1 * jnp.abs(jax.random.normal(kv, (out_ch,), jnp.float32)),
        })
        num_features = num_features // 2
        in_ch = out_ch
        out_ch = 2 * in_ch
    fc_in = in_ch * num_features
    key, k1, k2, k3, k4 = jax.random.split(key, 5)
    params["fc1_w"] = jax.random.normal(k1, (256, fc_in), jnp.float32) / jnp.sqrt(fc_in)
    params["fc1_b"] = jax.random.normal(k2, (256,), jnp.float32) * 0.01
    params["fc2_w"] = jax.random.normal(k3, (out_shape, 256), jnp.float32) / jnp.sqrt(256.0)
    params["fc2_b"] = jax.random.normal(k4, (out_shape,), jnp.float32) * 0.01
    return params


def prepare_params(params, *, input_shape, batch, eps=1e-5):
    """One-time re-layout of PyTorch-style params for the fused kernel (no per-call glue)."""
    first_w = params["blocks"][0]["convs"][0][0]
    K = int(first_w.shape[2])
    if K % 2 != 1:
        raise NotImplementedError(
            "fused kernel supports odd kernel_size ('same' convs) only")
    pad = K // 2

    conv_packed, pool_sels, bn_packed, blocks_meta = [], [], [], []
    L = int(input_shape)
    in_ch = 1
    for blk in params["blocks"]:
        convs_meta = []
        for (w, b) in blk["convs"]:
            cout, cin, kk = (int(s) for s in w.shape)
            # columns ordered k-major, ci-minor to match the kernel's im2col stacking
            w_flat = jnp.transpose(w, (0, 2, 1)).reshape(cout, kk * cin)
            conv_packed.append(jnp.concatenate([w_flat, b.reshape(cout, 1)], axis=1))
            convs_meta.append((cin, cout))
            in_ch = cout
        Lp = L // 2
        assert Lp >= 1, "sequence length collapsed to zero after pooling"
        # 0/1 selection matrix: compacts pairwise maxima to MaxPool1d(2) output positions
        psel = np.zeros((batch * L, batch * Lp), np.float32)
        for b_i in range(batch):
            for q in range(Lp):
                psel[b_i * L + 2 * q, b_i * Lp + q] = 1.0
        pool_sels.append(jnp.asarray(psel))
        scale = blk["gamma"] / jnp.sqrt(blk["var"] + eps)
        shift = blk["beta"] - blk["mean"] * scale
        bn_packed.append(jnp.stack([scale, shift], axis=1))        # (C, 2)
        blocks_meta.append({"convs": convs_meta, "L": L, "Lp": Lp})
        L = Lp

    C3, L3 = in_ch, L
    H, fc_in = (int(s) for s in params["fc1_w"].shape)
    assert fc_in == C3 * L3, (fc_in, C3, L3)
    out_shape = int(params["fc2_w"].shape[0])

    # fc1 weight (H, C3*L3) with flatten order (c, l)  ->  (L3, C3, H)
    w1p = jnp.transpose(params["fc1_w"].reshape(H, C3, L3), (2, 1, 0))
    # per-position gather matrices: gfc[l, b*L3 + l, b] = 1
    gfc = np.zeros((L3, batch * L3, batch), np.float32)
    for l in range(L3):
        for b_i in range(batch):
            gfc[l, b_i * L3 + l, b_i] = 1.0

    meta = {"B": int(batch), "K": K, "pad": pad, "L0": int(input_shape),
            "blocks": blocks_meta, "C3": C3, "L3": L3, "H": H, "out": out_shape}
    return {
        "conv": conv_packed,
        "pool": pool_sels,
        "bn": bn_packed,
        "w1p": w1p,
        "b1": params["fc1_b"].reshape(1, H),
        "gfc": jnp.asarray(gfc),
        "w2t": params["fc2_w"].T,
        "b2": params["fc2_b"].reshape(1, out_shape),
        "meta": meta,
    }


def numlayers_vgg_forward(x, prepped):
    """x: (B, input_shape) -> (B, out_shape), single fused pallas_call."""
    meta = prepped["meta"]
    B, L0 = meta["B"], meta["L0"]
    assert x.shape == (B, L0), x.shape
    # contiguity-preserving reshape (free): x_flat[0, b*L0 + l] = x[b, l]
    x_flat = x.astype(jnp.float32).reshape(1, B * L0)
    operands = ([x_flat] + list(prepped["conv"]) + list(prepped["pool"]) +
                list(prepped["bn"]) +
                [prepped["w1p"], prepped["b1"], prepped["gfc"],
                 prepped["w2t"], prepped["b2"]])
    kern = functools.partial(_fused_vgg_kernel, meta=meta)
    return pl.pallas_call(
        kern,
        out_shape=jax.ShapeDtypeStruct((B, meta["out"]), jnp.float32),
        in_specs=[VMEM] * len(operands),
        out_specs=VMEM,
    )(*operands)


# ----------------------------------------------------------------------------
# Pure-JAX eval-mode reference (mirrors the PyTorch module) for validation.
# ----------------------------------------------------------------------------
def _reference_forward(x, params, eps=1e-5):
    hp = jax.lax.Precision.HIGHEST
    B = x.shape[0]
    h = x.reshape(B, 1, -1).astype(jnp.float32)
    for blk in params["blocks"]:
        for (w, b) in blk["convs"]:
            K = w.shape[2]
            pad = K // 2
            L = h.shape[2]
            Lout = L + 2 * pad - (K - 1)
            hpad = jnp.pad(h, ((0, 0), (0, 0), (pad, pad)))
            acc = jnp.zeros((B, w.shape[0], Lout), jnp.float32)
            for k in range(K):
                acc = acc + jnp.einsum("oi,bil->bol", w[:, :, k],
                                       hpad[:, :, k:k + Lout], precision=hp)
            h = acc + b[None, :, None]
        h = jnp.maximum(h, 0.0)
        Lp = h.shape[2] // 2
        h = jnp.maximum(h[:, :, 0:2 * Lp:2], h[:, :, 1:2 * Lp:2])
        scale = blk["gamma"] / jnp.sqrt(blk["var"] + eps)
        shift = blk["beta"] - blk["mean"] * scale
        h = h * scale[None, :, None] + shift[None, :, None]
    h = h.reshape(B, -1)
    h = jnp.maximum(jnp.dot(h, params["fc1_w"].T, precision=hp) + params["fc1_b"], 0.0)
    return jnp.dot(h, params["fc2_w"].T, precision=hp) + params["fc2_b"]


if __name__ == "__main__":
    # Small, module-consistent hyper-parameters.
    INPUT_SHAPE = 16     # 1-D signal length
    OUT_SHAPE = 8        # n_classes
    NUM_LAYERS = 2       # convs per block
    KERNEL_SIZE = 3      # odd -> 'same' length convs
    CHANNEL_SIZE = 4
    BATCH = 2

    key = jax.random.PRNGKey(0)
    key, kx = jax.random.split(key)
    x = jax.random.normal(kx, (BATCH, INPUT_SHAPE), jnp.float32)

    raw_params = init_params(
        key,
        input_shape=INPUT_SHAPE,
        out_shape=OUT_SHAPE,
        num_layers=NUM_LAYERS,
        kernel_size=KERNEL_SIZE,
        channel_size=CHANNEL_SIZE,
    )
    prepped = prepare_params(raw_params, input_shape=INPUT_SHAPE, batch=BATCH)

    out = jax.block_until_ready(numlayers_vgg_forward(x, prepped))
    assert out.shape == (BATCH, OUT_SHAPE), out.shape
    assert bool(jnp.all(jnp.isfinite(out)))

    # Validate against the pure-JAX eval-mode reference.
    ref = jax.block_until_ready(_reference_forward(x, raw_params))
    max_err = float(jnp.max(jnp.abs(out - ref)))
    assert max_err < 5e-2, f"mismatch vs reference: max abs err = {max_err}"

    print("KERNEL_OK")
</pallas_src>

<mosaic_0001>
module attributes {stable_mosaic.version = 11 : i64} {
  func.func @_fused_vgg_kernel(%arg0: memref<1x32xf32, #tpu.memory_space<vmem>>, %arg1: memref<4x4xf32, #tpu.memory_space<vmem>>, %arg2: memref<4x13xf32, #tpu.memory_space<vmem>>, %arg3: memref<8x13xf32, #tpu.memory_space<vmem>>, %arg4: memref<8x25xf32, #tpu.memory_space<vmem>>, %arg5: memref<16x25xf32, #tpu.memory_space<vmem>>, %arg6: memref<16x49xf32, #tpu.memory_space<vmem>>, %arg7: memref<32x16xf32, #tpu.memory_space<vmem>>, %arg8: memref<16x8xf32, #tpu.memory_space<vmem>>, %arg9: memref<8x4xf32, #tpu.memory_space<vmem>>, %arg10: memref<4x2xf32, #tpu.memory_space<vmem>>, %arg11: memref<8x2xf32, #tpu.memory_space<vmem>>, %arg12: memref<16x2xf32, #tpu.memory_space<vmem>>, %arg13: memref<2x16x256xf32, #tpu.memory_space<vmem>>, %arg14: memref<1x256xf32, #tpu.memory_space<vmem>>, %arg15: memref<2x4x2xf32, #tpu.memory_space<vmem>>, %arg16: memref<256x8xf32, #tpu.memory_space<vmem>>, %arg17: memref<1x8xf32, #tpu.memory_space<vmem>>, %arg18: memref<2x8xf32, #tpu.memory_space<vmem>>) attributes {dimension_semantics = [], scalar_prefetch = 0 : i64, scratch_operands = 0 : i64, tpu.core_type = #tpu.core_type<tc>} {
    %c0 = arith.constant 0 : index
    %c0_0 = arith.constant 0 : index
    %0 = vector.load %arg0[%c0, %c0_0] : memref<1x32xf32, #tpu.memory_space<vmem>>, vector<1x32xf32>
    %1 = tpu.iota {dimensions = array<i32: 1>} : vector<1x16xi32>
    %2 = tpu.concatenate %1, %1 in 1 : vector<1x16xi32>, vector<1x16xi32> -> vector<1x32xi32>
    %c0_1 = arith.constant 0 : index
    %c0_2 = arith.constant 0 : index
    %3 = vector.load %arg1[%c0_1, %c0_2] : memref<4x4xf32, #tpu.memory_space<vmem>>, vector<4x4xf32>
    %cst = arith.constant 0.000000e+00 : f32
    %4 = vector.broadcast %cst : f32 to vector<1x1xf32>
    %5 = tpu.concatenate %4, %0, %4 in 1 : vector<1x1xf32>, vector<1x32xf32>, vector<1x1xf32> -> vector<1x34xf32>
    %6 = vector.extract_strided_slice %5 {offsets = [0, 0], sizes = [1, 32], strides = [1, 1]} : vector<1x34xf32> to vector<1x32xf32>
    %c1_i32 = arith.constant 1 : i32
    %7 = vector.broadcast %c1_i32 : i32 to vector<1x32xi32>
    %8 = arith.cmpi sge, %2, %7 : vector<1x32xi32>
    %c17_i32 = arith.constant 17 : i32
    %9 = vector.broadcast %c17_i32 : i32 to vector<1x32xi32>
    %10 = arith.cmpi slt, %2, %9 : vector<1x32xi32>
    %11 = arith.andi %8, %10 : vector<1x32xi1>
    %cst_3 = arith.constant 0.000000e+00 : f32
    %12 = vector.broadcast %cst_3 : f32 to vector<1x32xf32>
    %13 = arith.select %11, %6, %12 : vector<1x32xi1>, vector<1x32xf32>
    %14 = vector.extract_strided_slice %5 {offsets = [0, 1], sizes = [1, 32], strides = [1, 1]} : vector<1x34xf32> to vector<1x32xf32>
    %15 = vector.extract_strided_slice %5 {offsets = [0, 2], sizes = [1, 32], strides = [1, 1]} : vector<1x34xf32> to vector<1x32xf32>
    %c-1_i32 = arith.constant -1 : i32
    %16 = vector.broadcast %c-1_i32 : i32 to vector<1x32xi32>
    %17 = arith.cmpi sge, %2, %16 : vector<1x32xi32>
    %c15_i32 = arith.constant 15 : i32
    %18 = vector.broadcast %c15_i32 : i32 to vector<1x32xi32>
    %19 = arith.cmpi slt, %2, %18 : vector<1x32xi32>
    %20 = arith.andi %17, %19 : vector<1x32xi1>
    %cst_4 = arith.constant 0.000000e+00 : f32
    %21 = vector.broadcast %cst_4 : f32 to vector<1x32xf32>
    %22 = arith.select %20, %15, %21 : vector<1x32xi1>, vector<1x32xf32>
    %cst_5 = arith.constant 1.000000e+00 : f32
    %23 = vector.broadcast %cst_5 : f32 to vector<1x32xf32>
    %24 = tpu.concatenate %13, %14, %22, %23 in 0 : vector<1x32xf32>, vector<1x32xf32>, vector<1x32xf32>, vector<1x32xf32> -> vector<4x32xf32>
    %cst_6 = arith.constant dense<0.000000e+00> : vector<4x32xf32>
    %25 = tpu.matmul %3, %24, %cst_6 {dimension_numbers = #tpu.dot_dimension_numbers<[1], [0], [0], [1], [0, 0, 1, 1], [], []>} : vector<4x4xf32>, vector<4x32xf32>, vector<4x32xf32> -> vector<4x32xf32>
    %c0_7 = arith.constant 0 : index
    %c0_8 = arith.constant 0 : index
    %26 = vector.load %arg2[%c0_7, %c0_8] : memref<4x13xf32, #tpu.memory_space<vmem>>, vector<4x13xf32>
    %cst_9 = arith.constant 0.000000e+00 : f32
    %27 = vector.broadcast %cst_9 : f32 to vector<4x1xf32>
    %28 = tpu.concatenate %27, %25, %27 in 1 : vector<4x1xf32>, vector<4x32xf32>, vector<4x1xf32> -> vector<4x34xf32>
    %29 = vector.extract_strided_slice %28 {offsets = [0, 0], sizes = [4, 32], strides = [1, 1]} : vector<4x34xf32> to vector<4x32xf32>
    %c1_i32_10 = arith.constant 1 : i32
    %30 = vector.broadcast %c1_i32_10 : i32 to vector<1x32xi32>
    %31 = arith.cmpi sge, %2, %30 : vector<1x32xi32>
    %c17_i32_11 = arith.constant 17 : i32
    %32 = vector.broadcast %c17_i32_11 : i32 to vector<1x32xi32>
    %33 = arith.cmpi slt, %2, %32 : vector<1x32xi32>
    %34 = arith.andi %31, %33 : vector<1x32xi1>
    %cst_12 = arith.constant 0.000000e+00 : f32
    %35 = vector.shape_cast %34 : vector<1x32xi1> to vector<1x32xi1>
    %36 = vector.broadcast %35 : vector<1x32xi1> to vector<4x32xi1>
    %37 = vector.broadcast %cst_12 : f32 to vector<4x32xf32>
    %38 = arith.select %36, %29, %37 : vector<4x32xi1>, vector<4x32xf32>
    %39 = vector.extract_strided_slice %28 {offsets = [0, 1], sizes = [4, 32], strides = [1, 1]} : vector<4x34xf32> to vector<4x32xf32>
    %40 = vector.extract_strided_slice %28 {offsets = [0, 2], sizes = [4, 32], strides = [1, 1]} : vector<4x34xf32> to vector<4x32xf32>
    %c-1_i32_13 = arith.constant -1 : i32
    %41 = vector.broadcast %c-1_i32_13 : i32 to vector<1x32xi32>
    %42 = arith.cmpi sge, %2, %41 : vector<1x32xi32>
    %c15_i32_14 = arith.constant 15 : i32
    %43 = vector.broadcast %c15_i32_14 : i32 to vector<1x32xi32>
    %44 = arith.cmpi slt, %2, %43 : vector<1x32xi32>
    %45 = arith.andi %42, %44 : vector<1x32xi1>
    %cst_15 = arith.constant 0.000000e+00 : f32
    %46 = vector.shape_cast %45 : vector<1x32xi1> to vector<1x32xi1>
    %47 = vector.broadcast %46 : vector<1x32xi1> to vector<4x32xi1>
    %48 = vector.broadcast %cst_15 : f32 to vector<4x32xf32>
    %49 = arith.select %47, %40, %48 : vector<4x32xi1>, vector<4x32xf32>
    %cst_16 = arith.constant 1.000000e+00 : f32
    %50 = vector.broadcast %cst_16 : f32 to vector<1x32xf32>
    %51 = tpu.concatenate %38, %39, %49, %50 in 0 : vector<4x32xf32>, vector<4x32xf32>, vector<4x32xf32>, vector<1x32xf32> -> vector<13x32xf32>
    %cst_17 = arith.constant dense<0.000000e+00> : vector<4x32xf32>
    %52 = tpu.matmul %26, %51, %cst_17 {dimension_numbers = #tpu.dot_dimension_numbers<[1], [0], [0], [1], [0, 0, 1, 1], [], []>} : vector<4x13xf32>, vector<13x32xf32>, vector<4x32xf32> -> vector<4x32xf32>
    %cst_18 = arith.constant 0.000000e+00 : f32
    %53 = vector.broadcast %cst_18 : f32 to vector<4x32xf32>
    %54 = arith.maximumf %52, %53 : vector<4x32xf32>
    %55 = vector.extract_strided_slice %54 {offsets = [0, 1], sizes = [4, 31], strides = [1, 1]} : vector<4x32xf32> to vector<4x31xf32>
    %cst_19 = arith.constant 0.000000e+00 : f32
    %56 = vector.broadcast %cst_19 : f32 to vector<4x1xf32>
    %57 = tpu.concatenate %55, %56 in 1 : vector<4x31xf32>, vector<4x1xf32> -> vector<4x32xf32>
    %58 = arith.maximumf %54, %57 : vector<4x32xf32>
    %c0_20 = arith.constant 0 : index
    %c0_21 = arith.constant 0 : index
    %59 = vector.load %arg7[%c0_20, %c0_21] : memref<32x16xf32, #tpu.memory_space<vmem>>, vector<32x16xf32>
    %cst_22 = arith.constant dense<0.000000e+00> : vector<4x16xf32>
    %60 = tpu.matmul %58, %59, %cst_22 {dimension_numbers = #tpu.dot_dimension_numbers<[1], [0], [0], [1], [0, 0, 1, 1], [], []>} : vector<4x32xf32>, vector<32x16xf32>, vector<4x16xf32> -> vector<4x16xf32>
    %c0_23 = arith.constant 0 : index
    %c0_24 = arith.constant 0 : index
    %61 = vector.load %arg10[%c0_23, %c0_24] : memref<4x2xf32, #tpu.memory_space<vmem>>, vector<4x2xf32>
    %62 = vector.extract_strided_slice %61 {offsets = [0, 0], sizes = [4, 1], strides = [1, 1]} : vector<4x2xf32> to vector<4x1xf32>
    %63 = vector.broadcast %62 : vector<4x1xf32> to vector<4x16xf32>
    %64 = arith.mulf %60, %63 : vector<4x16xf32>
    %65 = vector.extract_strided_slice %61 {offsets = [0, 1], sizes = [4, 1], strides = [1, 1]} : vector<4x2xf32> to vector<4x1xf32>
    %66 = vector.broadcast %65 : vector<4x1xf32> to vector<4x16xf32>
    %67 = arith.addf %64, %66 : vector<4x16xf32>
    %68 = tpu.iota {dimensions = array<i32: 1>} : vector<1x8xi32>
    %69 = tpu.concatenate %68, %68 in 1 : vector<1x8xi32>, vector<1x8xi32> -> vector<1x16xi32>
    %c0_25 = arith.constant 0 : index
    %c0_26 = arith.constant 0 : index
    %70 = vector.load %arg3[%c0_25, %c0_26] : memref<8x13xf32, #tpu.memory_space<vmem>>, vector<8x13xf32>
    %cst_27 = arith.constant 0.000000e+00 : f32
    %71 = vector.broadcast %cst_27 : f32 to vector<4x1xf32>
    %72 = tpu.concatenate %71, %67, %71 in 1 : vector<4x1xf32>, vector<4x16xf32>, vector<4x1xf32> -> vector<4x18xf32>
    %73 = vector.extract_strided_slice %72 {offsets = [0, 0], sizes = [4, 16], strides = [1, 1]} : vector<4x18xf32> to vector<4x16xf32>
    %c1_i32_28 = arith.constant 1 : i32
    %74 = vector.broadcast %c1_i32_28 : i32 to vector<1x16xi32>
    %75 = arith.cmpi sge, %69, %74 : vector<1x16xi32>
    %c9_i32 = arith.constant 9 : i32
    %76 = vector.broadcast %c9_i32 : i32 to vector<1x16xi32>
    %77 = arith.cmpi slt, %69, %76 : vector<1x16xi32>
    %78 = arith.andi %75, %77 : vector<1x16xi1>
    %cst_29 = arith.constant 0.000000e+00 : f32
    %79 = vector.shape_cast %78 : vector<1x16xi1> to vector<1x16xi1>
    %80 = vector.broadcast %79 : vector<1x16xi1> to vector<4x16xi1>
    %81 = vector.broadcast %cst_29 : f32 to vector<4x16xf32>
    %82 = arith.select %80, %73, %81 : vector<4x16xi1>, vector<4x16xf32>
    %83 = vector.extract_strided_slice %72 {offsets = [0, 1], sizes = [4, 16], strides = [1, 1]} : vector<4x18xf32> to vector<4x16xf32>
    %84 = vector.extract_strided_slice %72 {offsets = [0, 2], sizes = [4, 16], strides = [1, 1]} : vector<4x18xf32> to vector<4x16xf32>
    %c-1_i32_30 = arith.constant -1 : i32
    %85 = vector.broadcast %c-1_i32_30 : i32 to vector<1x16xi32>
    %86 = arith.cmpi sge, %69, %85 : vector<1x16xi32>
    %c7_i32 = arith.constant 7 : i32
    %87 = vector.broadcast %c7_i32 : i32 to vector<1x16xi32>
    %88 = arith.cmpi slt, %69, %87 : vector<1x16xi32>
    %89 = arith.andi %86, %88 : vector<1x16xi1>
    %cst_31 = arith.constant 0.000000e+00 : f32
    %90 = vector.shape_cast %89 : vector<1x16xi1> to vector<1x16xi1>
    %91 = vector.broadcast %90 : vector<1x16xi1> to vector<4x16xi1>
    %92 = vector.broadcast %cst_31 : f32 to vector<4x16xf32>
    %93 = arith.select %91, %84, %92 : vector<4x16xi1>, vector<4x16xf32>
    %cst_32 = arith.constant 1.000000e+00 : f32
    %94 = vector.broadcast %cst_32 : f32 to vector<1x16xf32>
    %95 = tpu.concatenate %82, %83, %93, %94 in 0 : vector<4x16xf32>, vector<4x16xf32>, vector<4x16xf32>, vector<1x16xf32> -> vector<13x16xf32>
    %cst_33 = arith.constant dense<0.000000e+00> : vector<8x16xf32>
    %96 = tpu.matmul %70, %95, %cst_33 {dimension_numbers = #tpu.dot_dimension_numbers<[1], [0], [0], [1], [0, 0, 1, 1], [], []>} : vector<8x13xf32>, vector<13x16xf32>, vector<8x16xf32> -> vector<8x16xf32>
    %c0_34 = arith.constant 0 : index
    %c0_35 = arith.constant 0 : index
    %97 = vector.load %arg4[%c0_34, %c0_35] : memref<8x25xf32, #tpu.memory_space<vmem>>, vector<8x25xf32>
    %cst_36 = arith.constant 0.000000e+00 : f32
    %98 = vector.broadcast %cst_36 : f32 to vector<8x1xf32>
    %99 = tpu.concatenate %98, %96, %98 in 1 : vector<8x1xf32>, vector<8x16xf32>, vector<8x1xf32> -> vector<8x18xf32>
    %100 = vector.extract_strided_slice %99 {offsets = [0, 0], sizes = [8, 16], strides = [1, 1]} : vector<8x18xf32> to vector<8x16xf32>
    %c1_i32_37 = arith.constant 1 : i32
    %101 = vector.broadcast %c1_i32_37 : i32 to vector<1x16xi32>
    %102 = arith.cmpi sge, %69, %101 : vector<1x16xi32>
    %c9_i32_38 = arith.constant 9 : i32
    %103 = vector.broadcast %c9_i32_38 : i32 to vector<1x16xi32>
    %104 = arith.cmpi slt, %69, %103 : vector<1x16xi32>
    %105 = arith.andi %102, %104 : vector<1x16xi1>
    %cst_39 = arith.constant 0.000000e+00 : f32
    %106 = vector.shape_cast %105 : vector<1x16xi1> to vector<1x16xi1>
    %107 = vector.broadcast %106 : vector<1x16xi1> to vector<8x16xi1>
    %108 = vector.broadcast %cst_39 : f32 to vector<8x16xf32>
    %109 = arith.select %107, %100, %108 : vector<8x16xi1>, vector<8x16xf32>
    %110 = vector.extract_strided_slice %99 {offsets = [0, 1], sizes = [8, 16], strides = [1, 1]} : vector<8x18xf32> to vector<8x16xf32>
    %111 = vector.extract_strided_slice %99 {offsets = [0, 2], sizes = [8, 16], strides = [1, 1]} : vector<8x18xf32> to vector<8x16xf32>
    %c-1_i32_40 = arith.constant -1 : i32
    %112 = vector.broadcast %c-1_i32_40 : i32 to vector<1x16xi32>
    %113 = arith.cmpi sge, %69, %112 : vector<1x16xi32>
    %c7_i32_41 = arith.constant 7 : i32
    %114 = vector.broadcast %c7_i32_41 : i32 to vector<1x16xi32>
    %115 = arith.cmpi slt, %69, %114 : vector<1x16xi32>
    %116 = arith.andi %113, %115 : vector<1x16xi1>
    %cst_42 = arith.constant 0.000000e+00 : f32
    %117 = vector.shape_cast %116 : vector<1x16xi1> to vector<1x16xi1>
    %118 = vector.broadcast %117 : vector<1x16xi1> to vector<8x16xi1>
    %119 = vector.broadcast %cst_42 : f32 to vector<8x16xf32>
    %120 = arith.select %118, %111, %119 : vector<8x16xi1>, vector<8x16xf32>
    %cst_43 = arith.constant 1.000000e+00 : f32
    %121 = vector.broadcast %cst_43 : f32 to vector<1x16xf32>
    %122 = tpu.concatenate %109, %110, %120, %121 in 0 : vector<8x16xf32>, vector<8x16xf32>, vector<8x16xf32>, vector<1x16xf32> -> vector<25x16xf32>
    %cst_44 = arith.constant dense<0.000000e+00> : vector<8x16xf32>
    %123 = tpu.matmul %97, %122, %cst_44 {dimension_numbers = #tpu.dot_dimension_numbers<[1], [0], [0], [1], [0, 0, 1, 1], [], []>} : vector<8x25xf32>, vector<25x16xf32>, vector<8x16xf32> -> vector<8x16xf32>
    %cst_45 = arith.constant 0.000000e+00 : f32
    %124 = vector.broadcast %cst_45 : f32 to vector<8x16xf32>
    %125 = arith.maximumf %123, %124 : vector<8x16xf32>
    %126 = vector.extract_strided_slice %125 {offsets = [0, 1], sizes = [8, 15], strides = [1, 1]} : vector<8x16xf32> to vector<8x15xf32>
    %cst_46 = arith.constant 0.000000e+00 : f32
    %127 = vector.broadcast %cst_46 : f32 to vector<8x1xf32>
    %128 = tpu.concatenate %126, %127 in 1 : vector<8x15xf32>, vector<8x1xf32> -> vector<8x16xf32>
    %129 = arith.maximumf %125, %128 : vector<8x16xf32>
    %c0_47 = arith.constant 0 : index
    %c0_48 = arith.constant 0 : index
    %130 = vector.load %arg8[%c0_47, %c0_48] : memref<16x8xf32, #tpu.memory_space<vmem>>, vector<16x8xf32>
    %cst_49 = arith.constant dense<0.000000e+00> : vector<8x8xf32>
    %131 = tpu.matmul %129, %130, %cst_49 {dimension_numbers = #tpu.dot_dimension_numbers<[1], [0], [0], [1], [0, 0, 1, 1], [], []>} : vector<8x16xf32>, vector<16x8xf32>, vector<8x8xf32> -> vector<8x8xf32>
    %c0_50 = arith.constant 0 : index
    %c0_51 = arith.constant 0 : index
    %132 = vector.load %arg11[%c0_50, %c0_51] : memref<8x2xf32, #tpu.memory_space<vmem>>, vector<8x2xf32>
    %133 = vector.extract_strided_slice %132 {offsets = [0, 0], sizes = [8, 1], strides = [1, 1]} : vector<8x2xf32> to vector<8x1xf32>
    %134 = vector.broadcast %133 : vector<8x1xf32> to vector<8x8xf32>
    %135 = arith.mulf %131, %134 : vector<8x8xf32>
    %136 = vector.extract_strided_slice %132 {offsets = [0, 1], sizes = [8, 1], strides = [1, 1]} : vector<8x2xf32> to vector<8x1xf32>
    %137 = vector.broadcast %136 : vector<8x1xf32> to vector<8x8xf32>
    %138 = arith.addf %135, %137 : vector<8x8xf32>
    %139 = tpu.iota {dimensions = array<i32: 1>} : vector<1x4xi32>
    %140 = tpu.concatenate %139, %139 in 1 : vector<1x4xi32>, vector<1x4xi32> -> vector<1x8xi32>
    %c0_52 = arith.constant 0 : index
    %c0_53 = arith.constant 0 : index
    %141 = vector.load %arg5[%c0_52, %c0_53] : memref<16x25xf32, #tpu.memory_space<vmem>>, vector<16x25xf32>
    %cst_54 = arith.constant 0.000000e+00 : f32
    %142 = vector.broadcast %cst_54 : f32 to vector<8x1xf32>
    %143 = tpu.concatenate %142, %138, %142 in 1 : vector<8x1xf32>, vector<8x8xf32>, vector<8x1xf32> -> vector<8x10xf32>
    %144 = vector.extract_strided_slice %143 {offsets = [0, 0], sizes = [8, 8], strides = [1, 1]} : vector<8x10xf32> to vector<8x8xf32>
    %c1_i32_55 = arith.constant 1 : i32
    %145 = vector.broadcast %c1_i32_55 : i32 to vector<1x8xi32>
    %146 = arith.cmpi sge, %140, %145 : vector<1x8xi32>
    %c5_i32 = arith.constant 5 : i32
    %147 = vector.broadcast %c5_i32 : i32 to vector<1x8xi32>
    %148 = arith.cmpi slt, %140, %147 : vector<1x8xi32>
    %149 = arith.andi %146, %148 : vector<1x8xi1>
    %cst_56 = arith.constant 0.000000e+00 : f32
    %150 = vector.shape_cast %149 : vector<1x8xi1> to vector<1x8xi1>
    %151 = vector.broadcast %150 : vector<1x8xi1> to vector<8x8xi1>
    %152 = vector.broadcast %cst_56 : f32 to vector<8x8xf32>
    %153 = arith.select %151, %144, %152 : vector<8x8xi1>, vector<8x8xf32>
    %154 = vector.extract_strided_slice %143 {offsets = [0, 1], sizes = [8, 8], strides = [1, 1]} : vector<8x10xf32> to vector<8x8xf32>
    %155 = vector.extract_strided_slice %143 {offsets = [0, 2], sizes = [8, 8], strides = [1, 1]} : vector<8x10xf32> to vector<8x8xf32>
    %c-1_i32_57 = arith.constant -1 : i32
    %156 = vector.broadcast %c-1_i32_57 : i32 to vector<1x8xi32>
    %157 = arith.cmpi sge, %140, %156 : vector<1x8xi32>
    %c3_i32 = arith.constant 3 : i32
    %158 = vector.broadcast %c3_i32 : i32 to vector<1x8xi32>
    %159 = arith.cmpi slt, %140, %158 : vector<1x8xi32>
    %160 = arith.andi %157, %159 : vector<1x8xi1>
    %cst_58 = arith.constant 0.000000e+00 : f32
    %161 = vector.shape_cast %160 : vector<1x8xi1> to vector<1x8xi1>
    %162 = vector.broadcast %161 : vector<1x8xi1> to vector<8x8xi1>
    %163 = vector.broadcast %cst_58 : f32 to vector<8x8xf32>
    %164 = arith.select %162, %155, %163 : vector<8x8xi1>, vector<8x8xf32>
    %cst_59 = arith.constant 1.000000e+00 : f32
    %165 = vector.broadcast %cst_59 : f32 to vector<1x8xf32>
    %166 = tpu.concatenate %153, %154, %164, %165 in 0 : vector<8x8xf32>, vector<8x8xf32>, vector<8x8xf32>, vector<1x8xf32> -> vector<25x8xf32>
    %cst_60 = arith.constant dense<0.000000e+00> : vector<16x8xf32>
    %167 = tpu.matmul %141, %166, %cst_60 {dimension_numbers = #tpu.dot_dimension_numbers<[1], [0], [0], [1], [0, 0, 1, 1], [], []>} : vector<16x25xf32>, vector<25x8xf32>, vector<16x8xf32> -> vector<16x8xf32>
    %c0_61 = arith.constant 0 : index
    %c0_62 = arith.constant 0 : index
    %168 = vector.load %arg6[%c0_61, %c0_62] : memref<16x49xf32, #tpu.memory_space<vmem>>, vector<16x49xf32>
    %cst_63 = arith.constant 0.000000e+00 : f32
    %169 = vector.broadcast %cst_63 : f32 to vector<16x1xf32>
    %170 = tpu.concatenate %169, %167, %169 in 1 : vector<16x1xf32>, vector<16x8xf32>, vector<16x1xf32> -> vector<16x10xf32>
    %171 = vector.extract_strided_slice %170 {offsets = [0, 0], sizes = [16, 8], strides = [1, 1]} : vector<16x10xf32> to vector<16x8xf32>
    %c1_i32_64 = arith.constant 1 : i32
    %172 = vector.broadcast %c1_i32_64 : i32 to vector<1x8xi32>
    %173 = arith.cmpi sge, %140, %172 : vector<1x8xi32>
    %c5_i32_65 = arith.constant 5 : i32
    %174 = vector.broadcast %c5_i32_65 : i32 to vector<1x8xi32>
    %175 = arith.cmpi slt, %140, %174 : vector<1x8xi32>
    %176 = arith.andi %173, %175 : vector<1x8xi1>
    %cst_66 = arith.constant 0.000000e+00 : f32
    %177 = vector.shape_cast %176 : vector<1x8xi1> to vector<1x8xi1>
    %178 = vector.broadcast %177 : vector<1x8xi1> to vector<16x8xi1>
    %179 = vector.broadcast %cst_66 : f32 to vector<16x8xf32>
    %180 = arith.select %178, %171, %179 : vector<16x8xi1>, vector<16x8xf32>
    %181 = vector.extract_strided_slice %170 {offsets = [0, 1], sizes = [16, 8], strides = [1, 1]} : vector<16x10xf32> to vector<16x8xf32>
    %182 = vector.extract_strided_slice %170 {offsets = [0, 2], sizes = [16, 8], strides = [1, 1]} : vector<16x10xf32> to vector<16x8xf32>
    %c-1_i32_67 = arith.constant -1 : i32
    %183 = vector.broadcast %c-1_i32_67 : i32 to vector<1x8xi32>
    %184 = arith.cmpi sge, %140, %183 : vector<1x8xi32>
    %c3_i32_68 = arith.constant 3 : i32
    %185 = vector.broadcast %c3_i32_68 : i32 to vector<1x8xi32>
    %186 = arith.cmpi slt, %140, %185 : vector<1x8xi32>
    %187 = arith.andi %184, %186 : vector<1x8xi1>
    %cst_69 = arith.constant 0.000000e+00 : f32
    %188 = vector.shape_cast %187 : vector<1x8xi1> to vector<1x8xi1>
    %189 = vector.broadcast %188 : vector<1x8xi1> to vector<16x8xi1>
    %190 = vector.broadcast %cst_69 : f32 to vector<16x8xf32>
    %191 = arith.select %189, %182, %190 : vector<16x8xi1>, vector<16x8xf32>
    %cst_70 = arith.constant 1.000000e+00 : f32
    %192 = vector.broadcast %cst_70 : f32 to vector<1x8xf32>
    %193 = tpu.concatenate %180, %181, %191, %192 in 0 : vector<16x8xf32>, vector<16x8xf32>, vector<16x8xf32>, vector<1x8xf32> -> vector<49x8xf32>
    %cst_71 = arith.constant dense<0.000000e+00> : vector<16x8xf32>
    %194 = tpu.matmul %168, %193, %cst_71 {dimension_numbers = #tpu.dot_dimension_numbers<[1], [0], [0], [1], [0, 0, 1, 1], [], []>} : vector<16x49xf32>, vector<49x8xf32>, vector<16x8xf32> -> vector<16x8xf32>
    %cst_72 = arith.constant 0.000000e+00 : f32
    %195 = vector.broadcast %cst_72 : f32 to vector<16x8xf32>
    %196 = arith.maximumf %194, %195 : vector<16x8xf32>
    %197 = vector.extract_strided_slice %196 {offsets = [0, 1], sizes = [16, 7], strides = [1, 1]} : vector<16x8xf32> to vector<16x7xf32>
    %cst_73 = arith.constant 0.000000e+00 : f32
    %198 = vector.broadcast %cst_73 : f32 to vector<16x1xf32>
    %199 = tpu.concatenate %197, %198 in 1 : vector<16x7xf32>, vector<16x1xf32> -> vector<16x8xf32>
    %200 = arith.maximumf %196, %199 : vector<16x8xf32>
    %c0_74 = arith.constant 0 : index
    %c0_75 = arith.constant 0 : index
    %201 = vector.load %arg9[%c0_74, %c0_75] : memref<8x4xf32, #tpu.memory_space<vmem>>, vector<8x4xf32>
    %cst_76 = arith.constant dense<0.000000e+00> : vector<16x4xf32>
    %202 = tpu.matmul %200, %201, %cst_76 {dimension_numbers = #tpu.dot_dimension_numbers<[1], [0], [0], [1], [0, 0, 1, 1], [], []>} : vector<16x8xf32>, vector<8x4xf32>, vector<16x4xf32> -> vector<16x4xf32>
    %c0_77 = arith.constant 0 : index
    %c0_78 = arith.constant 0 : index
    %203 = vector.load %arg12[%c0_77, %c0_78] : memref<16x2xf32, #tpu.memory_space<vmem>>, vector<16x2xf32>
    %204 = vector.extract_strided_slice %203 {offsets = [0, 0], sizes = [16, 1], strides = [1, 1]} : vector<16x2xf32> to vector<16x1xf32>
    %205 = vector.broadcast %204 : vector<16x1xf32> to vector<16x4xf32>
    %206 = arith.mulf %202, %205 : vector<16x4xf32>
    %207 = vector.extract_strided_slice %203 {offsets = [0, 1], sizes = [16, 1], strides = [1, 1]} : vector<16x2xf32> to vector<16x1xf32>
    %208 = vector.broadcast %207 : vector<16x1xf32> to vector<16x4xf32>
    %209 = arith.addf %206, %208 : vector<16x4xf32>
    %cst_79 = arith.constant 0.000000e+00 : f32
    %210 = vector.broadcast %cst_79 : f32 to vector<2x256xf32>
    %c0_80 = arith.constant 0 : index
    %c0_81 = arith.constant 0 : index
    %c0_82 = arith.constant 0 : index
    %211 = vector.load %arg15[%c0_80, %c0_81, %c0_82] : memref<2x4x2xf32, #tpu.memory_space<vmem>>, vector<1x4x2xf32>
    %212 = vector.shape_cast %211 : vector<1x4x2xf32> to vector<4x2xf32>
    %cst_83 = arith.constant dense<0.000000e+00> : vector<16x2xf32>
    %213 = tpu.matmul %209, %212, %cst_83 {dimension_numbers = #tpu.dot_dimension_numbers<[1], [0], [0], [1], [0, 0, 1, 1], [], []>} : vector<16x4xf32>, vector<4x2xf32>, vector<16x2xf32> -> vector<16x2xf32>
    %c0_84 = arith.constant 0 : index
    %c0_85 = arith.constant 0 : index
    %c0_86 = arith.constant 0 : index
    %214 = vector.load %arg13[%c0_84, %c0_85, %c0_86] : memref<2x16x256xf32, #tpu.memory_space<vmem>>, vector<1x16x256xf32>
    %215 = vector.shape_cast %214 : vector<1x16x256xf32> to vector<16x256xf32>
    %cst_87 = arith.constant dense<0.000000e+00> : vector<2x256xf32>
    %216 = tpu.matmul %213, %215, %cst_87 {dimension_numbers = #tpu.dot_dimension_numbers<[0], [0], [1], [1], [0, 1, 1, 1], [], []>} : vector<16x2xf32>, vector<16x256xf32>, vector<2x256xf32> -> vector<2x256xf32>
    %217 = arith.addf %210, %216 : vector<2x256xf32>
    %c1 = arith.constant 1 : index
    %c0_88 = arith.constant 0 : index
    %c0_89 = arith.constant 0 : index
    %218 = vector.load %arg15[%c1, %c0_88, %c0_89] : memref<2x4x2xf32, #tpu.memory_space<vmem>>, vector<1x4x2xf32>
    %219 = vector.shape_cast %218 : vector<1x4x2xf32> to vector<4x2xf32>
    %cst_90 = arith.constant dense<0.000000e+00> : vector<16x2xf32>
    %220 = tpu.matmul %209, %219, %cst_90 {dimension_numbers = #tpu.dot_dimension_numbers<[1], [0], [0], [1], [0, 0, 1, 1], [], []>} : vector<16x4xf32>, vector<4x2xf32>, vector<16x2xf32> -> vector<16x2xf32>
    %c1_91 = arith.constant 1 : index
    %c0_92 = arith.constant 0 : index
    %c0_93 = arith.constant 0 : index
    %221 = vector.load %arg13[%c1_91, %c0_92, %c0_93] : memref<2x16x256xf32, #tpu.memory_space<vmem>>, vector<1x16x256xf32>
    %222 = vector.shape_cast %221 : vector<1x16x256xf32> to vector<16x256xf32>
    %cst_94 = arith.constant dense<0.000000e+00> : vector<2x256xf32>
    %223 = tpu.matmul %220, %222, %cst_94 {dimension_numbers = #tpu.dot_dimension_numbers<[0], [0], [1], [1], [0, 1, 1, 1], [], []>} : vector<16x2xf32>, vector<16x256xf32>, vector<2x256xf32> -> vector<2x256xf32>
    %224 = arith.addf %217, %223 : vector<2x256xf32>
    %c0_95 = arith.constant 0 : index
    %c0_96 = arith.constant 0 : index
    %225 = vector.load %arg14[%c0_95, %c0_96] : memref<1x256xf32, #tpu.memory_space<vmem>>, vector<1x256xf32>
    %226 = vector.broadcast %225 : vector<1x256xf32> to vector<2x256xf32>
    %227 = arith.addf %224, %226 : vector<2x256xf32>
    %cst_97 = arith.constant 0.000000e+00 : f32
    %228 = vector.broadcast %cst_97 : f32 to vector<2x256xf32>
    %229 = arith.maximumf %227, %228 : vector<2x256xf32>
    %c0_98 = arith.constant 0 : index
    %c0_99 = arith.constant 0 : index
    %230 = vector.load %arg16[%c0_98, %c0_99] : memref<256x8xf32, #tpu.memory_space<vmem>>, vector<256x8xf32>
    %cst_100 = arith.constant dense<0.000000e+00> : vector<2x8xf32>
    %231 = tpu.matmul %229, %230, %cst_100 {dimension_numbers = #tpu.dot_dimension_numbers<[1], [0], [0], [1], [0, 0, 1, 1], [], []>} : vector<2x256xf32>, vector<256x8xf32>, vector<2x8xf32> -> vector<2x8xf32>
    %c0_101 = arith.constant 0 : index
    %c0_102 = arith.constant 0 : index
    %232 = vector.load %arg17[%c0_101, %c0_102] : memref<1x8xf32, #tpu.memory_space<vmem>>, vector<1x8xf32>
    %233 = vector.broadcast %232 : vector<1x8xf32> to vector<2x8xf32>
    %234 = arith.addf %231, %233 : vector<2x8xf32>
    %c0_103 = arith.constant 0 : index
    %c0_104 = arith.constant 0 : index
    %235 = vector.load %arg18[%c0_103, %c0_104] : memref<2x8xf32, #tpu.memory_space<vmem>>, vector<2x8xf32>
    tpu.vector_store %arg18[%c0_103, %c0_104], %234 {strides = array<i32>} : memref<2x8xf32, #tpu.memory_space<vmem>>, vector<2x8xf32>,
    return
  }
}

</mosaic_0001>

<llo_original>
// kernel: tpu_custom_call.1
$region0: #{tpu_custom_call.1}
  #allocation0 [shape = 'u32[]', space=smem, size = 0x4, offset = 0x4, fixed_abs, tag = 'smem constant byte address 0x4 - core index']
  #allocation1 [shape = 'u32[144,128]{1,0:T(1,128)}', space=vmem, size = 0x12000, scoped, tag = 'internal scratch']
  %s0 = inlined_call_operand.vmem [shape: f32[1,32], index: 0, kind: input, shape index: {}]
  %s1 = inlined_call_operand.vmem [shape: f32[4,4], index: 1, kind: input, shape index: {}]
  %s2 = inlined_call_operand.vmem [shape: f32[4,13], index: 2, kind: input, shape index: {}]
  %s3 = inlined_call_operand.vmem [shape: f32[8,13], index: 3, kind: input, shape index: {}]
  %s4 = inlined_call_operand.vmem [shape: f32[8,25], index: 4, kind: input, shape index: {}]
  %s5 = inlined_call_operand.vmem [shape: f32[16,25], index: 5, kind: input, shape index: {}]
  %s6 = inlined_call_operand.vmem [shape: f32[16,49], index: 6, kind: input, shape index: {}]
  %s7 = inlined_call_operand.vmem [shape: f32[32,16], index: 7, kind: input, shape index: {}]
  %s8 = inlined_call_operand.vmem [shape: f32[16,8], index: 8, kind: input, shape index: {}]
  %s9 = inlined_call_operand.vmem [shape: f32[8,4], index: 9, kind: input, shape index: {}]
  %s10 = inlined_call_operand.vmem [shape: f32[4,2], index: 10, kind: input, shape index: {}]
  %s11 = inlined_call_operand.vmem [shape: f32[8,2], index: 11, kind: input, shape index: {}]
  %s12 = inlined_call_operand.vmem [shape: f32[16,2], index: 12, kind: input, shape index: {}]
  %s13 = inlined_call_operand.vmem [shape: f32[2,16,256], index: 13, kind: input, shape index: {}]
  %s14 = inlined_call_operand.vmem [shape: f32[1,256], index: 14, kind: input, shape index: {}]
  %s15 = inlined_call_operand.vmem [shape: f32[2,4,2], index: 15, kind: input, shape index: {}]
  %s16 = inlined_call_operand.vmem [shape: f32[256,8], index: 16, kind: input, shape index: {}]
  %s17 = inlined_call_operand.vmem [shape: f32[1,8], index: 17, kind: input, shape index: {}]
  %s18 = inlined_call_operand.hbm [shape: f32[2,8], index: 18, kind: output, shape index: {}]
  %s19 = sld [smem:[#allocation0]]
  $region82: #{tpu_custom_call.1} parent=0
    _
  %s21 = ssub.s32 1, %s19
  %s22 = scalar_select 0, %s21, %s19
  $region1: #{tpu_custom_call.1} parent=0
    #allocation2 [shape = 'u8[1024]{0}', space=vmem, size = 0x400, scoped, tag = 'output window, operand 0, single buffered']
    #allocation3 [shape = 's32[1]{0}', space=sflag, size = 0x4, scoped, tag = 'scoped memory for tpu_custom_call.1']
    %23 = vsyncpa [#allocation3], 0
    // Predicated region
    $region2: #{tpu_custom_call.1} parent=1 // pred_check
      _
    $region3: #{tpu_custom_call.1} parent=1 // pred_check_branch
      %25 = sbr.rel (0) target = $region5
    $region4: #{tpu_custom_call.1} parent=1 // pred_region
      _
    $region5: #{tpu_custom_call.1} parent=1 // pred_fallthru
      _
    // Predicated region
    $region6: #{tpu_custom_call.1} parent=1 // pred_check
      _
    $region7: #{tpu_custom_call.1} parent=1 // pred_check_branch
      %27 = sbr.rel (0) target = $region9
    $region8: #{tpu_custom_call.1} parent=1 // pred_region
      _
    $region9: #{tpu_custom_call.1} parent=1 // pred_fallthru
      _
    // Predicated region
    $region10: #{tpu_custom_call.1} parent=1 // pred_check
      _
    $region11: #{tpu_custom_call.1} parent=1 // pred_check_branch
      %29 = sbr.rel (0) target = $region13
    $region12: #{tpu_custom_call.1} parent=1 // pred_region
      _
    $region13: #{tpu_custom_call.1} parent=1 // pred_fallthru
      _
    // Predicated region
    $region14: #{tpu_custom_call.1} parent=1 // pred_check
      _
    $region15: #{tpu_custom_call.1} parent=1 // pred_check_branch
      %31 = sbr.rel (0) target = $region17
    $region16: #{tpu_custom_call.1} parent=1 // pred_region
      _
    $region17: #{tpu_custom_call.1} parent=1 // pred_fallthru
      _
    // Predicated region
    $region18: #{tpu_custom_call.1} parent=1 // pred_check
      _
    $region19: #{tpu_custom_call.1} parent=1 // pred_check_branch
      %33 = sbr.rel (0) target = $region21
    $region20: #{tpu_custom_call.1} parent=1 // pred_region
      _
    $region21: #{tpu_custom_call.1} parent=1 // pred_fallthru
      _
    // Predicated region
    $region22: #{tpu_custom_call.1} parent=1 // pred_check
      _
    $region23: #{tpu_custom_call.1} parent=1 // pred_check_branch
      %35 = sbr.rel (0) target = $region25
    $region24: #{tpu_custom_call.1} parent=1 // pred_region
      _
    $region25: #{tpu_custom_call.1} parent=1 // pred_fallthru
      _
    // Predicated region
    $region26: #{tpu_custom_call.1} parent=1 // pred_check
      _
    $region27: #{tpu_custom_call.1} parent=1 // pred_check_branch
      %37 = sbr.rel (0) target = $region29
    $region28: #{tpu_custom_call.1} parent=1 // pred_region
      _
    $region29: #{tpu_custom_call.1} parent=1 // pred_fallthru
      _
    // Predicated region
    $region30: #{tpu_custom_call.1} parent=1 // pred_check
      _
    $region31: #{tpu_custom_call.1} parent=1 // pred_check_branch
      %39 = sbr.rel (0) target = $region33
    $region32: #{tpu_custom_call.1} parent=1 // pred_region
      _
    $region33: #{tpu_custom_call.1} parent=1 // pred_fallthru
      _
    // Predicated region
    $region34: #{tpu_custom_call.1} parent=1 // pred_check
      _
    $region35: #{tpu_custom_call.1} parent=1 // pred_check_branch
      %41 = sbr.rel (0) target = $region37
    $region36: #{tpu_custom_call.1} parent=1 // pred_region
      _
    $region37: #{tpu_custom_call.1} parent=1 // pred_fallthru
      _
    // Predicated region
    $region38: #{tpu_custom_call.1} parent=1 // pred_check
      _
    $region39: #{tpu_custom_call.1} parent=1 // pred_check_branch
      %43 = sbr.rel (0) target = $region41
    $region40: #{tpu_custom_call.1} parent=1 // pred_region
      _
    $region41: #{tpu_custom_call.1} parent=1 // pred_fallthru
      _
    // Predicated region
    $region42: #{tpu_custom_call.1} parent=1 // pred_check
      _
    $region43: #{tpu_custom_call.1} parent=1 // pred_check_branch
      %45 = sbr.rel (0) target = $region45
    $region44: #{tpu_custom_call.1} parent=1 // pred_region
      _
    $region45: #{tpu_custom_call.1} parent=1 // pred_fallthru
      _
    // Predicated region
    $region46: #{tpu_custom_call.1} parent=1 // pred_check
      _
    $region47: #{tpu_custom_call.1} parent=1 // pred_check_branch
      %47 = sbr.rel (0) target = $region49
    $region48: #{tpu_custom_call.1} parent=1 // pred_region
      _
    $region49: #{tpu_custom_call.1} parent=1 // pred_fallthru
      _
    // Predicated region
    $region50: #{tpu_custom_call.1} parent=1 // pred_check
      _
    $region51: #{tpu_custom_call.1} parent=1 // pred_check_branch
      %49 = sbr.rel (0) target = $region53
    $region52: #{tpu_custom_call.1} parent=1 // pred_region
      _
    $region53: #{tpu_custom_call.1} parent=1 // pred_fallthru
      _
    // Predicated region
    $region54: #{tpu_custom_call.1} parent=1 // pred_check
      _
    $region55: #{tpu_custom_call.1} parent=1 // pred_check_branch
      %51 = sbr.rel (0) target = $region57
    $region56: #{tpu_custom_call.1} parent=1 // pred_region
      _
    $region57: #{tpu_custom_call.1} parent=1 // pred_fallthru
      _
    // Predicated region
    $region58: #{tpu_custom_call.1} parent=1 // pred_check
      _
    $region59: #{tpu_custom_call.1} parent=1 // pred_check_branch
      %53 = sbr.rel (0) target = $region61
    $region60: #{tpu_custom_call.1} parent=1 // pred_region
      _
    $region61: #{tpu_custom_call.1} parent=1 // pred_fallthru
      _
    // Predicated region
    $region62: #{tpu_custom_call.1} parent=1 // pred_check
      _
    $region63: #{tpu_custom_call.1} parent=1 // pred_check_branch
      %55 = sbr.rel (0) target = $region65
    $region64: #{tpu_custom_call.1} parent=1 // pred_region
      _
    $region65: #{tpu_custom_call.1} parent=1 // pred_fallthru
      _
    // Predicated region
    $region66: #{tpu_custom_call.1} parent=1 // pred_check
      _
    $region67: #{tpu_custom_call.1} parent=1 // pred_check_branch
      %57 = sbr.rel (0) target = $region69
    $region68: #{tpu_custom_call.1} parent=1 // pred_region
      _
    $region69: #{tpu_custom_call.1} parent=1 // pred_fallthru
      _
    // Predicated region
    $region70: #{tpu_custom_call.1} parent=1 // pred_check
      _
    $region71: #{tpu_custom_call.1} parent=1 // pred_check_branch
      %59 = sbr.rel (0) target = $region73
    $region72: #{tpu_custom_call.1} parent=1 // pred_region
      _
    $region73: #{tpu_custom_call.1} parent=1 // pred_fallthru
      _
    %v60 = vld [vmem:[%s0] sm:$0x1]
    %v61 = vlaneseq
    %v62 = vand.u32 %v61, 127
    %63 = vrot.lane.b32.xlu0 %v62, 16
    %v64 = vpop.permute.xlu0 %63
    %vm65 = vcmask 130048
    %v66 = vsel %vm65, %v62, %v64
    %v67 = vld [vmem:[%s1] sm:$0xf]
    %v69 = vlaneseq
    %v70 = vshrl.u32 %v69, 7
    %v71 = vsub.s32 0, %v70
    %v72 = vrot.slane %v60, %v71
    %73 = vrot.lane.b32.xlu0 %v72, 1
    %v74 = vpop.permute.xlu0 %73
    %vm76 = vcmask 7168
    %v77 = vsel %vm76, 0.0, %v74
    %vm78 = vcmask 269312
    %v79 = vsel %vm78, %v77, 0.0
    %vm80 = vcmp.ge.s32.totalorder %v66, 1
    %vm81 = vcmp.lt.s32.totalorder %v66, 17
    %vm82 = vmand %vm80, %vm81
    %v83 = vsel %vm82, %v79, 0.0
    %vm84 = vcmp.ge.s32.totalorder %v66, 4294967295
    %vm85 = vcmp.lt.s32.totalorder %v66, 15
    %vm86 = vmand %vm84, %vm85
    %88 = vrot.lane.b32.xlu0 %v79, 126
    %v89 = vpop.permute.xlu0 %88
    %v91 = vsel %vm86, %v89, 0.0
    %v92 = vrot.slane %v79, 7
    %93 = vrot.lane.b32.xlu0 %v92, 127
    %v94 = vpop.permute.xlu0 %93
    %v97 = vrot.slane %v91, 6
    %vm99 = vcmask 1040384
    %v100 = vsel %vm99, %v83, %v94
    %vm101 = vcmask 1041408
    %v102 = vsel %vm101, %v100, %v97
    %vm103 = vcmask 1042432
    %v104 = vsel %vm103, %v102, 1.0
    %vm105 = vcmask 31744
    %v107 = vsel %vm105, %v67, 0
    %vm109 = vcmask 1043456
    %v111 = vsel %vm109, %v104, 0
    %113 = vmatprep.subr.mxu0 0.0
    %114 = vmatpush1.msra.mxu0 %v111
    %115 = vmatprep.subr.mxu0 0.0
    %116 = vmatpush1.msra.mxu0 0.0
    %117 = vmatprep.subr.mxu0 0.0
    %118 = vmatpush1.msra.mxu0 0.0
    %119 = vmatprep.subr.mxu0 0.0
    %120 = vmatpush1.msra.mxu0 0.0
    %121 = vmatprep.subr.mxu0 0.0
    %122 = vmatpush1.msra.mxu0 0.0
    %123 = vmatprep.subr.mxu0 0.0
    %124 = vmatpush1.msra.mxu0 0.0
    %125 = vmatprep.subr.mxu0 0.0
    %126 = vmatpush1.msra.mxu0 0.0
    %127 = vmatprep.subr.mxu0 0.0
    %128 = vmatpush1.msra.mxu0 0.0
    %129 = vmatprep.subr.mxu0 0.0
    %130 = vmatpush1.msra.mxu0 0.0
    %131 = vmatprep.subr.mxu0 0.0
    %132 = vmatpush1.msra.mxu0 0.0
    %133 = vmatprep.subr.mxu0 0.0
    %134 = vmatpush1.msra.mxu0 0.0
    %135 = vmatprep.subr.mxu0 0.0
    %136 = vmatpush1.msra.mxu0 0.0
    %137 = vmatprep.subr.mxu0 0.0
    %138 = vmatpush1.msra.mxu0 0.0
    %139 = vmatprep.subr.mxu0 0.0
    %140 = vmatpush1.msra.mxu0 0.0
    %141 = vmatprep.subr.mxu0 0.0
    %142 = vmatpush1.msra.mxu0 0.0
    %143 = vmatprep.subr.mxu0 0.0
    %144 = vmatpush1.msra.mxu0 0.0
    %145 = vmatprep.subr.mxu0 0.0
    %146 = vmatpush1.msra.mxu0 0.0
    %147 = vmatprep.subr.mxu0 0.0
    %148 = vmatpush1.msra.mxu0 0.0
    %149 = vmatprep.subr.mxu0 0.0
    %150 = vmatpush1.msra.mxu0 0.0
    %151 = vmatprep.subr.mxu0 0.0
    %152 = vmatpush1.msra.mxu0 0.0
    %153 = vmatprep.subr.mxu0 0.0
    %154 = vmatpush1.msra.mxu0 0.0
    %155 = vmatprep.subr.mxu0 0.0
    %156 = vmatpush1.msra.mxu0 0.0
    %157 = vmatprep.subr.mxu0 0.0
    %158 = vmatpush1.msra.mxu0 0.0
    %159 = vmatprep.subr.mxu0 0.0
    %160 = vmatpush1.msra.mxu0 0.0
    %161 = vmatprep.subr.mxu0 0.0
    %162 = vmatpush1.msra.mxu0 0.0
    %163 = vmatprep.subr.mxu0 0.0
    %164 = vmatpush1.msra.mxu0 0.0
    %165 = vmatprep.subr.mxu0 0.0
    %166 = vmatpush1.msra.mxu0 0.0
    %167 = vmatprep.subr.mxu0 0.0
    %168 = vmatpush1.msra.mxu0 0.0
    %169 = vmatprep.subr.mxu0 0.0
    %170 = vmatpush1.msra.mxu0 0.0
    %171 = vmatprep.subr.mxu0 0.0
    %172 = vmatpush1.msra.mxu0 0.0
    %173 = vmatprep.subr.mxu0 0.0
    %174 = vmatpush1.msra.mxu0 0.0
    %175 = vmatprep.subr.mxu0 0.0
    %176 = vmatpush1.msra.mxu0 0.0
    %177 = vmatprep.mubr.f32.mxu0 0.0
    %178 = vmatmul.mubr.f32.gmra.mrb[0].mxu0 %v107
    %v179 = vpop.f32.mrb[0].mxu0
    %v180 = vadd.f32 0.0, %v179
    %v181 = vpop.f32.mrb[0].mxu0
    %182 = vdwg.mxu0
    %v183 = vld [vmem:[%s2] sm:$0xf]
    %185 = vrot.lane.b32.xlu0 %v180, 1
    %v186 = vpop.permute.xlu0 %185
    %v188 = vsel %vm76, 0.0, %v186
    %v189 = vsel %vm78, %v188, 0.0
    %v190 = vsel %vm82, 1, 0
    %v191 = vlaneseq
    %v192 = vshrl.u32 %v191, 7
    %v193 = vsub.s32 0, %v192
    %v194 = vrot.slane %v190, %v193
    %vm195 = vcmp.eq.s32.totalorder %v194, 1
    %v196 = vsel %vm195, %v189, 0.0
    %v197 = vsel %vm86, 1, 0
    %v198 = vlaneseq
    %v199 = vshrl.u32 %v198, 7
    %v200 = vsub.s32 0, %v199
    %v201 = vrot.slane %v197, %v200
    %vm202 = vcmp.eq.s32.totalorder %v201, 1
    %204 = vrot.lane.b32.xlu0 %v189, 126
    %v205 = vpop.permute.xlu0 %204
    %v207 = vsel %vm202, %v205, 0.0
    %v208 = vrot.slane %v189, 4
    %209 = vrot.lane.b32.xlu0 %v208, 127
    %v210 = vpop.permute.xlu0 %209
    %v212 = vsel %vm109, %v196, %v210
    %v213 = vsel %vm109, %v207, 1.0
    %vm214 = vcmask 105472
    %v216 = vsel %vm214, %v183, 0
    %vm218 = vcmask 1044480
    %v220 = vsel %vm218, %v213, 0
    %222 = vmatprep.subr.mxu0 0.0
    %223 = vmatpush1.msra.mxu0 %v212
    %224 = vmatprep.subr.mxu0 0.0
    %225 = vmatpush1.msra.mxu0 %v220
    %226 = vmatprep.subr.mxu0 0.0
    %227 = vmatpush1.msra.mxu0 0.0
    %228 = vmatprep.subr.mxu0 0.0
    %229 = vmatpush1.msra.mxu0 0.0
    %230 = vmatprep.subr.mxu0 0.0
    %231 = vmatpush1.msra.mxu0 0.0
    %232 = vmatprep.subr.mxu0 0.0
    %233 = vmatpush1.msra.mxu0 0.0
    %234 = vmatprep.subr.mxu0 0.0
    %235 = vmatpush1.msra.mxu0 0.0
    %236 = vmatprep.subr.mxu0 0.0
    %237 = vmatpush1.msra.mxu0 0.0
    %238 = vmatprep.subr.mxu0 0.0
    %239 = vmatpush1.msra.mxu0 0.0
    %240 = vmatprep.subr.mxu0 0.0
    %241 = vmatpush1.msra.mxu0 0.0
    %242 = vmatprep.subr.mxu0 0.0
    %243 = vmatpush1.msra.mxu0 0.0
    %244 = vmatprep.subr.mxu0 0.0
    %245 = vmatpush1.msra.mxu0 0.0
    %246 = vmatprep.subr.mxu0 0.0
    %247 = vmatpush1.msra.mxu0 0.0
    %248 = vmatprep.subr.mxu0 0.0
    %249 = vmatpush1.msra.mxu0 0.0
    %250 = vmatprep.subr.mxu0 0.0
    %251 = vmatpush1.msra.mxu0 0.0
    %252 = vmatprep.subr.mxu0 0.0
    %253 = vmatpush1.msra.mxu0 0.0
    %254 = vmatprep.subr.mxu0 0.0
    %255 = vmatpush1.msra.mxu0 0.0
    %256 = vmatprep.subr.mxu0 0.0
    %257 = vmatpush1.msra.mxu0 0.0
    %258 = vmatprep.subr.mxu0 0.0
    %259 = vmatpush1.msra.mxu0 0.0
    %260 = vmatprep.subr.mxu0 0.0
    %261 = vmatpush1.msra.mxu0 0.0
    %262 = vmatprep.subr.mxu0 0.0
    %263 = vmatpush1.msra.mxu0 0.0
    %264 = vmatprep.subr.mxu0 0.0
    %265 = vmatpush1.msra.mxu0 0.0
    %266 = vmatprep.subr.mxu0 0.0
    %267 = vmatpush1.msra.mxu0 0.0
    %268 = vmatprep.subr.mxu0 0.0
    %269 = vmatpush1.msra.mxu0 0.0
    %270 = vmatprep.subr.mxu0 0.0
    %271 = vmatpush1.msra.mxu0 0.0
    %272 = vmatprep.subr.mxu0 0.0
    %273 = vmatpush1.msra.mxu0 0.0
    %274 = vmatprep.subr.mxu0 0.0
    %275 = vmatpush1.msra.mxu0 0.0
    %276 = vmatprep.subr.mxu0 0.0
    %277 = vmatpush1.msra.mxu0 0.0
    %278 = vmatprep.subr.mxu0 0.0
    %279 = vmatpush1.msra.mxu0 0.0
    %280 = vmatprep.subr.mxu0 0.0
    %281 = vmatpush1.msra.mxu0 0.0
    %282 = vmatprep.subr.mxu0 0.0
    %283 = vmatpush1.msra.mxu0 0.0
    %284 = vmatprep.subr.mxu0 0.0
    %285 = vmatpush1.msra.mxu0 0.0
    %286 = vmatprep.mubr.f32.mxu0 0.0
    %287 = vmatmul.mubr.f32.gmra.mrb[0].mxu0 %v216
    %v288 = vpop.f32.mrb[0].mxu0
    %v289 = vadd.f32 0.0, %v288
    %v290 = vpop.f32.mrb[0].mxu0
    %291 = vdwg.mxu0
    %v292 = vmax.f32 %v289, 0.0
    %294 = vrot.lane.b32.xlu0 %v292, 127
    %v295 = vpop.permute.xlu0 %294
    %vm297 = vcmask 252928
    %v298 = vsel %vm297, %v295, 0.0
    %v299 = vmax.f32 %v292, %v298
    %v300 = vld [vmem:[%s7] sm:$0xff]
    %v301 = vld [vmem:[%s7 + $0x8] sm:$0xff]
    %v302 = vld [vmem:[%s7 + $0x10] sm:$0xff]
    %v303 = vld [vmem:[%s7 + $0x18] sm:$0xff]
    %vm304 = vcmask 261120
    %v306 = vsel %vm304, %v299, 0
    %308 = vmatprep.subr.mxu0 0.0
    %309 = vmatpush1.msra.mxu0 %v300
    %310 = vmatprep.subr.mxu0 0.0
    %311 = vmatpush1.msra.mxu0 %v301
    %312 = vmatprep.subr.mxu0 0.0
    %313 = vmatpush1.msra.mxu0 %v302
    %314 = vmatprep.subr.mxu0 0.0
    %315 = vmatpush1.msra.mxu0 %v303
    %316 = vmatprep.subr.mxu0 0.0
    %317 = vmatpush1.msra.mxu0 0.0
    %318 = vmatprep.subr.mxu0 0.0
    %319 = vmatpush1.msra.mxu0 0.0
    %320 = vmatprep.subr.mxu0 0.0
    %321 = vmatpush1.msra.mxu0 0.0
    %322 = vmatprep.subr.mxu0 0.0
    %323 = vmatpush1.msra.mxu0 0.0
    %324 = vmatprep.subr.mxu0 0.0
    %325 = vmatpush1.msra.mxu0 0.0
    %326 = vmatprep.subr.mxu0 0.0
    %327 = vmatpush1.msra.mxu0 0.0
    %328 = vmatprep.subr.mxu0 0.0
    %329 = vmatpush1.msra.mxu0 0.0
    %330 = vmatprep.subr.mxu0 0.0
    %331 = vmatpush1.msra.mxu0 0.0
    %332 = vmatprep.subr.mxu0 0.0
    %333 = vmatpush1.msra.mxu0 0.0
    %334 = vmatprep.subr.mxu0 0.0
    %335 = vmatpush1.msra.mxu0 0.0
    %336 = vmatprep.subr.mxu0 0.0
    %337 = vmatpush1.msra.mxu0 0.0
    %338 = vmatprep.subr.mxu0 0.0
    %339 = vmatpush1.msra.mxu0 0.0
    %340 = vmatprep.subr.mxu0 0.0
    %341 = vmatpush1.msra.mxu0 0.0
    %342 = vmatprep.subr.mxu0 0.0
    %343 = vmatpush1.msra.mxu0 0.0
    %344 = vmatprep.subr.mxu0 0.0
    %345 = vmatpush1.msra.mxu0 0.0
    %346 = vmatprep.subr.mxu0 0.0
    %347 = vmatpush1.msra.mxu0 0.0
    %348 = vmatprep.subr.mxu0 0.0
    %349 = vmatpush1.msra.mxu0 0.0
    %350 = vmatprep.subr.mxu0 0.0
    %351 = vmatpush1.msra.mxu0 0.0
    %352 = vmatprep.subr.mxu0 0.0
    %353 = vmatpush1.msra.mxu0 0.0
    %354 = vmatprep.subr.mxu0 0.0
    %355 = vmatpush1.msra.mxu0 0.0
    %356 = vmatprep.subr.mxu0 0.0
    %357 = vmatpush1.msra.mxu0 0.0
    %358 = vmatprep.subr.mxu0 0.0
    %359 = vmatpush1.msra.mxu0 0.0
    %360 = vmatprep.subr.mxu0 0.0
    %361 = vmatpush1.msra.mxu0 0.0
    %362 = vmatprep.subr.mxu0 0.0
    %363 = vmatpush1.msra.mxu0 0.0
    %364 = vmatprep.subr.mxu0 0.0
    %365 = vmatpush1.msra.mxu0 0.0
    %366 = vmatprep.subr.mxu0 0.0
    %367 = vmatpush1.msra.mxu0 0.0
    %368 = vmatprep.subr.mxu0 0.0
    %369 = vmatpush1.msra.mxu0 0.0
    %370 = vmatprep.subr.mxu0 0.0
    %371 = vmatpush1.msra.mxu0 0.0
    %372 = vmatprep.mubr.f32.mxu0 0.0
    %373 = vmatmul.mubr.f32.gmra.mrb[0].mxu0 %v306
    %v374 = vpop.f32.mrb[0].mxu0
    %v375 = vadd.f32 0.0, %v374
    %v376 = vpop.f32.mrb[0].mxu0
    %377 = vdwg.mxu0
    %v378 = vld [vmem:[%s10] sm:$0xf]
    %380 = vset.pattern.permute.xlu0 0
    %381 = vperm.xlu0 %380, %v378
    %v382 = vpop.permute.xlu0 %381
    %v384 = vmul.f32 %v375, %v382
    %385 = vset.pattern.permute.xlu0 1
    %386 = vperm.xlu0 %385, %v378
    %v387 = vpop.permute.xlu0 %386
    %v389 = vadd.f32 %v384, %v387
    %390 = vrot.lane.b32.xlu0 %v62, 8
    %v391 = vpop.permute.xlu0 %390
    %vm392 = vcmask 64512
    %v393 = vsel %vm392, %v62, %v391
    %v394 = vld [vmem:[%s3] sm:$0xff]
    %396 = vrot.lane.b32.xlu0 %v389, 1
    %v397 = vpop.permute.xlu0 %396
    %v399 = vsel %vm76, 0.0, %v397
    %vm400 = vcmask 138240
    %v401 = vsel %vm400, %v399, 0.0
    %vm402 = vcmp.ge.s32.totalorder %v393, 1
    %vm403 = vcmp.lt.s32.totalorder %v393, 9
    %vm404 = vmand %vm402, %vm403
    %v405 = vsel %vm404, 1, 0
    %v406 = vlaneseq
    %v407 = vshrl.u32 %v406, 7
    %v408 = vsub.s32 0, %v407
    %v409 = vrot.slane %v405, %v408
    %vm410 = vcmp.eq.s32.totalorder %v409, 1
    %v411 = vsel %vm410, %v401, 0.0
    %vm412 = vcmp.ge.s32.totalorder %v393, 4294967295
    %vm413 = vcmp.lt.s32.totalorder %v393, 7
    %vm414 = vmand %vm412, %vm413
    %v415 = vsel %vm414, 1, 0
    %v416 = vlaneseq
    %v417 = vshrl.u32 %v416, 7
    %v418 = vsub.s32 0, %v417
    %v419 = vrot.slane %v415, %v418
    %vm420 = vcmp.eq.s32.totalorder %v419, 1
    %422 = vrot.lane.b32.xlu0 %v401, 126
    %v423 = vpop.permute.xlu0 %422
    %v425 = vsel %vm420, %v423, 0.0
    %v426 = vrot.slane %v401, 4
    %427 = vrot.lane.b32.xlu0 %v426, 127
    %v428 = vpop.permute.xlu0 %427
    %v430 = vsel %vm109, %v411, %v428
    %v431 = vsel %vm109, %v425, 1.0
    %v433 = vsel %vm214, %v394, 0
    %v436 = vsel %vm218, %v431, 0
    %438 = vmatprep.subr.mxu0 0.0
    %439 = vmatpush1.msra.mxu0 %v430
    %440 = vmatprep.subr.mxu0 0.0
    %441 = vmatpush1.msra.mxu0 %v436
    %442 = vmatprep.subr.mxu0 0.0
    %443 = vmatpush1.msra.mxu0 0.0
    %444 = vmatprep.subr.mxu0 0.0
    %445 = vmatpush1.msra.mxu0 0.0
    %446 = vmatprep.subr.mxu0 0.0
    %447 = vmatpush1.msra.mxu0 0.0
    %448 = vmatprep.subr.mxu0 0.0
    %449 = vmatpush1.msra.mxu0 0.0
    %450 = vmatprep.subr.mxu0 0.0
    %451 = vmatpush1.msra.mxu0 0.0
    %452 = vmatprep.subr.mxu0 0.0
    %453 = vmatpush1.msra.mxu0 0.0
    %454 = vmatprep.subr.mxu0 0.0
    %455 = vmatpush1.msra.mxu0 0.0
    %456 = vmatprep.subr.mxu0 0.0
    %457 = vmatpush1.msra.mxu0 0.0
    %458 = vmatprep.subr.mxu0 0.0
    %459 = vmatpush1.msra.mxu0 0.0
    %460 = vmatprep.subr.mxu0 0.0
    %461 = vmatpush1.msra.mxu0 0.0
    %462 = vmatprep.subr.mxu0 0.0
    %463 = vmatpush1.msra.mxu0 0.0
    %464 = vmatprep.subr.mxu0 0.0
    %465 = vmatpush1.msra.mxu0 0.0
    %466 = vmatprep.subr.mxu0 0.0
    %467 = vmatpush1.msra.mxu0 0.0
    %468 = vmatprep.subr.mxu0 0.0
    %469 = vmatpush1.msra.mxu0 0.0
    %470 = vmatprep.subr.mxu0 0.0
    %471 = vmatpush1.msra.mxu0 0.0
    %472 = vmatprep.subr.mxu0 0.0
    %473 = vmatpush1.msra.mxu0 0.0
    %474 = vmatprep.subr.mxu0 0.0
    %475 = vmatpush1.msra.mxu0 0.0
    %476 = vmatprep.subr.mxu0 0.0
    %477 = vmatpush1.msra.mxu0 0.0
    %478 = vmatprep.subr.mxu0 0.0
    %479 = vmatpush1.msra.mxu0 0.0
    %480 = vmatprep.subr.mxu0 0.0
    %481 = vmatpush1.msra.mxu0 0.0
    %482 = vmatprep.subr.mxu0 0.0
    %483 = vmatpush1.msra.mxu0 0.0
    %484 = vmatprep.subr.mxu0 0.0
    %485 = vmatpush1.msra.mxu0 0.0
    %486 = vmatprep.subr.mxu0 0.0
    %487 = vmatpush1.msra.mxu0 0.0
    %488 = vmatprep.subr.mxu0 0.0
    %489 = vmatpush1.msra.mxu0 0.0
    %490 = vmatprep.subr.mxu0 0.0
    %491 = vmatpush1.msra.mxu0 0.0
    %492 = vmatprep.subr.mxu0 0.0
    %493 = vmatpush1.msra.mxu0 0.0
    %494 = vmatprep.subr.mxu0 0.0
    %495 = vmatpush1.msra.mxu0 0.0
    %496 = vmatprep.subr.mxu0 0.0
    %497 = vmatpush1.msra.mxu0 0.0
    %498 = vmatprep.subr.mxu0 0.0
    %499 = vmatpush1.msra.mxu0 0.0
    %500 = vmatprep.subr.mxu0 0.0
    %501 = vmatpush1.msra.mxu0 0.0
    %502 = vmatprep.mubr.f32.mxu0 0.0
    %503 = vmatmul.mubr.f32.gmra.mrb[0].mxu0 %v433
    %v504 = vpop.f32.mrb[0].mxu0
    %v505 = vadd.f32 0.0, %v504
    %v506 = vpop.f32.mrb[0].mxu0
    %507 = vdwg.mxu0
    %v508 = vld [vmem:[%s4] sm:$0xff]
    %510 = vrot.lane.b32.xlu0 %v505, 1
    %v511 = vpop.permute.xlu0 %510
    %v513 = vsel %vm76, 0.0, %v511
    %v514 = vsel %vm400, %v513, 0.0
    %v515 = vsel %vm410, %v514, 0.0
    %517 = vrot.lane.b32.xlu0 %v514, 126
    %v518 = vpop.permute.xlu0 %517
    %v520 = vsel %vm420, %v518, 0.0
    %521 = vrot.lane.b32.xlu0 %v514, 127
    %v522 = vpop.permute.xlu0 %521
    %vm524 = vcmask 203776
    %v526 = vsel %vm524, %v508, 0
    %v529 = vsel %vm99, 1.0, 0
    %531 = vmatprep.subr.mxu0 0.0
    %532 = vmatpush1.msra.mxu0 %v515
    %533 = vmatprep.subr.mxu0 0.0
    %534 = vmatpush1.msra.mxu0 %v522
    %535 = vmatprep.subr.mxu0 0.0
    %536 = vmatpush1.msra.mxu0 %v520
    %537 = vmatprep.subr.mxu0 0.0
    %538 = vmatpush1.msra.mxu0 %v529
    %539 = vmatprep.subr.mxu0 0.0
    %540 = vmatpush1.msra.mxu0 0.0
    %541 = vmatprep.subr.mxu0 0.0
    %542 = vmatpush1.msra.mxu0 0.0
    %543 = vmatprep.subr.mxu0 0.0
    %544 = vmatpush1.msra.mxu0 0.0
    %545 = vmatprep.subr.mxu0 0.0
    %546 = vmatpush1.msra.mxu0 0.0
    %547 = vmatprep.subr.mxu0 0.0
    %548 = vmatpush1.msra.mxu0 0.0
    %549 = vmatprep.subr.mxu0 0.0
    %550 = vmatpush1.msra.mxu0 0.0
    %551 = vmatprep.subr.mxu0 0.0
    %552 = vmatpush1.msra.mxu0 0.0
    %553 = vmatprep.subr.mxu0 0.0
    %554 = vmatpush1.msra.mxu0 0.0
    %555 = vmatprep.subr.mxu0 0.0
    %556 = vmatpush1.msra.mxu0 0.0
    %557 = vmatprep.subr.mxu0 0.0
    %558 = vmatpush1.msra.mxu0 0.0
    %559 = vmatprep.subr.mxu0 0.0
    %560 = vmatpush1.msra.mxu0 0.0
    %561 = vmatprep.subr.mxu0 0.0
    %562 = vmatpush1.msra.mxu0 0.0
    %563 = vmatprep.subr.mxu0 0.0
    %564 = vmatpush1.msra.mxu0 0.0
    %565 = vmatprep.subr.mxu0 0.0
    %566 = vmatpush1.msra.mxu0 0.0
    %567 = vmatprep.subr.mxu0 0.0
    %568 = vmatpush1.msra.mxu0 0.0
    %569 = vmatprep.subr.mxu0 0.0
    %570 = vmatpush1.msra.mxu0 0.0
    %571 = vmatprep.subr.mxu0 0.0
    %572 = vmatpush1.msra.mxu0 0.0
    %573 = vmatprep.subr.mxu0 0.0
    %574 = vmatpush1.msra.mxu0 0.0
    %575 = vmatprep.subr.mxu0 0.0
    %576 = vmatpush1.msra.mxu0 0.0
    %577 = vmatprep.subr.mxu0 0.0
    %578 = vmatpush1.msra.mxu0 0.0
    %579 = vmatprep.subr.mxu0 0.0
    %580 = vmatpush1.msra.mxu0 0.0
    %581 = vmatprep.subr.mxu0 0.0
    %582 = vmatpush1.msra.mxu0 0.0
    %583 = vmatprep.subr.mxu0 0.0
    %584 = vmatpush1.msra.mxu0 0.0
    %585 = vmatprep.subr.mxu0 0.0
    %586 = vmatpush1.msra.mxu0 0.0
    %587 = vmatprep.subr.mxu0 0.0
    %588 = vmatpush1.msra.mxu0 0.0
    %589 = vmatprep.subr.mxu0 0.0
    %590 = vmatpush1.msra.mxu0 0.0
    %591 = vmatprep.subr.mxu0 0.0
    %592 = vmatpush1.msra.mxu0 0.0
    %593 = vmatprep.subr.mxu0 0.0
    %594 = vmatpush1.msra.mxu0 0.0
    %595 = vmatprep.mubr.f32.mxu0 0.0
    %596 = vmatmul.mubr.f32.gmra.mrb[0].mxu0 %v526
    %v597 = vpop.f32.mrb[0].mxu0
    %v598 = vadd.f32 0.0, %v597
    %v599 = vpop.f32.mrb[0].mxu0
    %600 = vdwg.mxu0
    %v601 = vmax.f32 %v598, 0.0
    %603 = vrot.lane.b32.xlu0 %v601, 127
    %v604 = vpop.permute.xlu0 %603
    %vm606 = vcmask 121856
    %v607 = vsel %vm606, %v604, 0.0
    %v608 = vmax.f32 %v601, %v607
    %v609 = vld [vmem:[%s8] sm:$0xff]
    %v610 = vld [vmem:[%s8 + $0x8] sm:$0xff]
    %v612 = vsel %vm65, %v608, 0
    %614 = vmatprep.subr.mxu0 0.0
    %615 = vmatpush1.msra.mxu0 %v609
    %616 = vmatprep.subr.mxu0 0.0
    %617 = vmatpush1.msra.mxu0 %v610
    %618 = vmatprep.subr.mxu0 0.0
    %619 = vmatpush1.msra.mxu0 0.0
    %620 = vmatprep.subr.mxu0 0.0
    %621 = vmatpush1.msra.mxu0 0.0
    %622 = vmatprep.subr.mxu0 0.0
    %623 = vmatpush1.msra.mxu0 0.0
    %624 = vmatprep.subr.mxu0 0.0
    %625 = vmatpush1.msra.mxu0 0.0
    %626 = vmatprep.subr.mxu0 0.0
    %627 = vmatpush1.msra.mxu0 0.0
    %628 = vmatprep.subr.mxu0 0.0
    %629 = vmatpush1.msra.mxu0 0.0
    %630 = vmatprep.subr.mxu0 0.0
    %631 = vmatpush1.msra.mxu0 0.0
    %632 = vmatprep.subr.mxu0 0.0
    %633 = vmatpush1.msra.mxu0 0.0
    %634 = vmatprep.subr.mxu0 0.0
    %635 = vmatpush1.msra.mxu0 0.0
    %636 = vmatprep.subr.mxu0 0.0
    %637 = vmatpush1.msra.mxu0 0.0
    %638 = vmatprep.subr.mxu0 0.0
    %639 = vmatpush1.msra.mxu0 0.0
    %640 = vmatprep.subr.mxu0 0.0
    %641 = vmatpush1.msra.mxu0 0.0
    %642 = vmatprep.subr.mxu0 0.0
    %643 = vmatpush1.msra.mxu0 0.0
    %644 = vmatprep.subr.mxu0 0.0
    %645 = vmatpush1.msra.mxu0 0.0
    %646 = vmatprep.subr.mxu0 0.0
    %647 = vmatpush1.msra.mxu0 0.0
    %648 = vmatprep.subr.mxu0 0.0
    %649 = vmatpush1.msra.mxu0 0.0
    %650 = vmatprep.subr.mxu0 0.0
    %651 = vmatpush1.msra.mxu0 0.0
    %652 = vmatprep.subr.mxu0 0.0
    %653 = vmatpush1.msra.mxu0 0.0
    %654 = vmatprep.subr.mxu0 0.0
    %655 = vmatpush1.msra.mxu0 0.0
    %656 = vmatprep.subr.mxu0 0.0
    %657 = vmatpush1.msra.mxu0 0.0
    %658 = vmatprep.subr.mxu0 0.0
    %659 = vmatpush1.msra.mxu0 0.0
    %660 = vmatprep.subr.mxu0 0.0
    %661 = vmatpush1.msra.mxu0 0.0
    %662 = vmatprep.subr.mxu0 0.0
    %663 = vmatpush1.msra.mxu0 0.0
    %664 = vmatprep.subr.mxu0 0.0
    %665 = vmatpush1.msra.mxu0 0.0
    %666 = vmatprep.subr.mxu0 0.0
    %667 = vmatpush1.msra.mxu0 0.0
    %668 = vmatprep.subr.mxu0 0.0
    %669 = vmatpush1.msra.mxu0 0.0
    %670 = vmatprep.subr.mxu0 0.0
    %671 = vmatpush1.msra.mxu0 0.0
    %672 = vmatprep.subr.mxu0 0.0
    %673 = vmatpush1.msra.mxu0 0.0
    %674 = vmatprep.subr.mxu0 0.0
    %675 = vmatpush1.msra.mxu0 0.0
    %676 = vmatprep.subr.mxu0 0.0
    %677 = vmatpush1.msra.mxu0 0.0
    %678 = vmatprep.mubr.f32.mxu0 0.0
    %679 = vmatmul.mubr.f32.gmra.mrb[0].mxu0 %v612
    %v680 = vpop.f32.mrb[0].mxu0
    %v681 = vadd.f32 0.0, %v680
    %v682 = vpop.f32.mrb[0].mxu0
    %683 = vdwg.mxu0
    %v684 = vld [vmem:[%s11] sm:$0xff]
    %686 = vset.pattern.permute.xlu0 0
    %687 = vperm.xlu0 %686, %v684
    %v688 = vpop.permute.xlu0 %687
    %v690 = vmul.f32 %v681, %v688
    %691 = vset.pattern.permute.xlu0 1
    %692 = vperm.xlu0 %691, %v684
    %v693 = vpop.permute.xlu0 %692
    %v695 = vadd.f32 %v690, %v693
    %696 = vrot.lane.b32.xlu0 %v62, 4
    %v697 = vpop.permute.xlu0 %696
    %v698 = vsel %vm105, %v62, %v697
    %v699 = vld [vmem:[%s5] sm:$0xff]
    %v700 = vld [vmem:[%s5 + $0x8] sm:$0xff]
    %702 = vrot.lane.b32.xlu0 %v695, 1
    %v703 = vpop.permute.xlu0 %702
    %v705 = vsel %vm76, 0.0, %v703
    %vm706 = vcmask 72704
    %v707 = vsel %vm706, %v705, 0.0
    %vm708 = vcmp.ge.s32.totalorder %v698, 1
    %vm709 = vcmp.lt.s32.totalorder %v698, 5
    %vm710 = vmand %vm708, %vm709
    %v711 = vsel %vm710, 1, 0
    %v712 = vlaneseq
    %v713 = vshrl.u32 %v712, 7
    %v714 = vsub.s32 0, %v713
    %v715 = vrot.slane %v711, %v714
    %vm716 = vcmp.eq.s32.totalorder %v715, 1
    %v717 = vsel %vm716, %v707, 0.0
    %vm718 = vcmp.ge.s32.totalorder %v698, 4294967295
    %vm719 = vcmp.lt.s32.totalorder %v698, 3
    %vm720 = vmand %vm718, %vm719
    %v721 = vsel %vm720, 1, 0
    %v722 = vlaneseq
    %v723 = vshrl.u32 %v722, 7
    %v724 = vsub.s32 0, %v723
    %v725 = vrot.slane %v721, %v724
    %vm726 = vcmp.eq.s32.totalorder %v725, 1
    %728 = vrot.lane.b32.xlu0 %v707, 126
    %v729 = vpop.permute.xlu0 %728
    %v731 = vsel %vm726, %v729, 0.0
    %732 = vrot.lane.b32.xlu0 %v707, 127
    %v733 = vpop.permute.xlu0 %732
    %v736 = vsel %vm524, %v699, 0
    %v739 = vsel %vm524, %v700, 0
    %741 = vmatprep.subr.mxu0 0.0
    %742 = vmatpush1.msra.mxu0 %v717
    %743 = vmatprep.subr.mxu0 0.0
    %744 = vmatpush1.msra.mxu0 %v733
    %745 = vmatprep.subr.mxu0 0.0
    %746 = vmatpush1.msra.mxu0 %v731
    %747 = vmatprep.subr.mxu0 0.0
    %748 = vmatpush1.msra.mxu0 %v529
    %749 = vmatprep.subr.mxu0 0.0
    %750 = vmatpush1.msra.mxu0 0.0
    %751 = vmatprep.subr.mxu0 0.0
    %752 = vmatpush1.msra.mxu0 0.0
    %753 = vmatprep.subr.mxu0 0.0
    %754 = vmatpush1.msra.mxu0 0.0
    %755 = vmatprep.subr.mxu0 0.0
    %756 = vmatpush1.msra.mxu0 0.0
    %757 = vmatprep.subr.mxu0 0.0
    %758 = vmatpush1.msra.mxu0 0.0
    %759 = vmatprep.subr.mxu0 0.0
    %760 = vmatpush1.msra.mxu0 0.0
    %761 = vmatprep.subr.mxu0 0.0
    %762 = vmatpush1.msra.mxu0 0.0
    %763 = vmatprep.subr.mxu0 0.0
    %764 = vmatpush1.msra.mxu0 0.0
    %765 = vmatprep.subr.mxu0 0.0
    %766 = vmatpush1.msra.mxu0 0.0
    %767 = vmatprep.subr.mxu0 0.0
    %768 = vmatpush1.msra.mxu0 0.0
    %769 = vmatprep.subr.mxu0 0.0
    %770 = vmatpush1.msra.mxu0 0.0
    %771 = vmatprep.subr.mxu0 0.0
    %772 = vmatpush1.msra.mxu0 0.0
    %773 = vmatprep.subr.mxu0 0.0
    %774 = vmatpush1.msra.mxu0 0.0
    %775 = vmatprep.subr.mxu0 0.0
    %776 = vmatpush1.msra.mxu0 0.0
    %777 = vmatprep.subr.mxu0 0.0
    %778 = vmatpush1.msra.mxu0 0.0
    %779 = vmatprep.subr.mxu0 0.0
    %780 = vmatpush1.msra.mxu0 0.0
    %781 = vmatprep.subr.mxu0 0.0
    %782 = vmatpush1.msra.mxu0 0.0
    %783 = vmatprep.subr.mxu0 0.0
    %784 = vmatpush1.msra.mxu0 0.0
    %785 = vmatprep.subr.mxu0 0.0
    %786 = vmatpush1.msra.mxu0 0.0
    %787 = vmatprep.subr.mxu0 0.0
    %788 = vmatpush1.msra.mxu0 0.0
    %789 = vmatprep.subr.mxu0 0.0
    %790 = vmatpush1.msra.mxu0 0.0
    %791 = vmatprep.subr.mxu0 0.0
    %792 = vmatpush1.msra.mxu0 0.0
    %793 = vmatprep.subr.mxu0 0.0
    %794 = vmatpush1.msra.mxu0 0.0
    %795 = vmatprep.subr.mxu0 0.0
    %796 = vmatpush1.msra.mxu0 0.0
    %797 = vmatprep.subr.mxu0 0.0
    %798 = vmatpush1.msra.mxu0 0.0
    %799 = vmatprep.subr.mxu0 0.0
    %800 = vmatpush1.msra.mxu0 0.0
    %801 = vmatprep.subr.mxu0 0.0
    %802 = vmatpush1.msra.mxu0 0.0
    %803 = vmatprep.subr.mxu0 0.0
    %804 = vmatpush1.msra.mxu0 0.0
    %805 = vmatprep.mubr.f32.mxu0 0.0
    %806 = vmatmul.mubr.f32.gmra.mrb[0].mxu0 %v736
    %v807 = vpop.f32.mrb[0].mxu0
    %v808 = vadd.f32 0.0, %v807
    %v809 = vpop.f32.mrb[0].mxu0
    %810 = vmatprep.mubr.f32.mxu0 0.0
    %811 = vmatmul.mubr.f32.gmra.mrb[0].mxu0 %v739
    %v812 = vpop.f32.mrb[0].mxu0
    %v813 = vadd.f32 0.0, %v812
    %v814 = vpop.f32.mrb[0].mxu0
    %815 = vdwg.mxu0
    %v816 = vld [vmem:[%s6] sm:$0xff]
    %v817 = vld [vmem:[%s6 + $0x8] sm:$0xff]
    %820 = vrot.lane.b32.xlu0 %v808, 1
    %v821 = vpop.permute.xlu0 %820
    %822 = vrot.lane.b32.xlu0 %v813, 1
    %v823 = vpop.permute.xlu0 %822
    %v826 = vsel %vm76, 0.0, %v821
    %v827 = vsel %vm76, 0.0, %v823
    %v828 = vsel %vm706, %v826, 0.0
    %v829 = vsel %vm706, %v827, 0.0
    %v830 = vsel %vm716, %v828, 0.0
    %v831 = vsel %vm716, %v829, 0.0
    %834 = vrot.lane.b32.xlu0 %v828, 126
    %v835 = vpop.permute.xlu0 %834
    %836 = vrot.lane.b32.xlu0 %v829, 126
    %v837 = vpop.permute.xlu0 %836
    %v840 = vsel %vm726, %v835, 0.0
    %v841 = vsel %vm726, %v837, 0.0
    %842 = vrot.lane.b32.xlu0 %v828, 127
    %v843 = vpop.permute.xlu0 %842
    %844 = vrot.lane.b32.xlu0 %v829, 127
    %v845 = vpop.permute.xlu0 %844
    %vm848 = vcmask 400384
    %v850 = vsel %vm848, %v816, 0
    %v853 = vsel %vm848, %v817, 0
    %855 = vmatprep.subr.mxu0 0.0
    %856 = vmatpush1.msra.mxu0 %v830
    %857 = vmatprep.subr.mxu0 0.0
    %858 = vmatpush1.msra.mxu0 %v831
    %859 = vmatprep.subr.mxu0 0.0
    %860 = vmatpush1.msra.mxu0 %v843
    %861 = vmatprep.subr.mxu0 0.0
    %862 = vmatpush1.msra.mxu0 %v845
    %863 = vmatprep.subr.mxu0 0.0
    %864 = vmatpush1.msra.mxu0 %v840
    %865 = vmatprep.subr.mxu0 0.0
    %866 = vmatpush1.msra.mxu0 %v841
    %867 = vmatprep.subr.mxu0 0.0
    %868 = vmatpush1.msra.mxu0 %v529
    %869 = vmatprep.subr.mxu0 0.0
    %870 = vmatpush1.msra.mxu0 0.0
    %871 = vmatprep.subr.mxu0 0.0
    %872 = vmatpush1.msra.mxu0 0.0
    %873 = vmatprep.subr.mxu0 0.0
    %874 = vmatpush1.msra.mxu0 0.0
    %875 = vmatprep.subr.mxu0 0.0
    %876 = vmatpush1.msra.mxu0 0.0
    %877 = vmatprep.subr.mxu0 0.0
    %878 = vmatpush1.msra.mxu0 0.0
    %879 = vmatprep.subr.mxu0 0.0
    %880 = vmatpush1.msra.mxu0 0.0
    %881 = vmatprep.subr.mxu0 0.0
    %882 = vmatpush1.msra.mxu0 0.0
    %883 = vmatprep.subr.mxu0 0.0
    %884 = vmatpush1.msra.mxu0 0.0
    %885 = vmatprep.subr.mxu0 0.0
    %886 = vmatpush1.msra.mxu0 0.0
    %887 = vmatprep.subr.mxu0 0.0
    %888 = vmatpush1.msra.mxu0 0.0
    %889 = vmatprep.subr.mxu0 0.0
    %890 = vmatpush1.msra.mxu0 0.0
    %891 = vmatprep.subr.mxu0 0.0
    %892 = vmatpush1.msra.mxu0 0.0
    %893 = vmatprep.subr.mxu0 0.0
    %894 = vmatpush1.msra.mxu0 0.0
    %895 = vmatprep.subr.mxu0 0.0
    %896 = vmatpush1.msra.mxu0 0.0
    %897 = vmatprep.subr.mxu0 0.0
    %898 = vmatpush1.msra.mxu0 0.0
    %899 = vmatprep.subr.mxu0 0.0
    %900 = vmatpush1.msra.mxu0 0.0
    %901 = vmatprep.subr.mxu0 0.0
    %902 = vmatpush1.msra.mxu0 0.0
    %903 = vmatprep.subr.mxu0 0.0
    %904 = vmatpush1.msra.mxu0 0.0
    %905 = vmatprep.subr.mxu0 0.0
    %906 = vmatpush1.msra.mxu0 0.0
    %907 = vmatprep.subr.mxu0 0.0
    %908 = vmatpush1.msra.mxu0 0.0
    %909 = vmatprep.subr.mxu0 0.0
    %910 = vmatpush1.msra.mxu0 0.0
    %911 = vmatprep.subr.mxu0 0.0
    %912 = vmatpush1.msra.mxu0 0.0
    %913 = vmatprep.subr.mxu0 0.0
    %914 = vmatpush1.msra.mxu0 0.0
    %915 = vmatprep.subr.mxu0 0.0
    %916 = vmatpush1.msra.mxu0 0.0
    %917 = vmatprep.subr.mxu0 0.0
    %918 = vmatpush1.msra.mxu0 0.0
    %919 = vmatprep.mubr.f32.mxu0 0.0
    %920 = vmatmul.mubr.f32.gmra.mrb[0].mxu0 %v850
    %v921 = vpop.f32.mrb[0].mxu0
    %v922 = vadd.f32 0.0, %v921
    %v923 = vpop.f32.mrb[0].mxu0
    %924 = vmatprep.mubr.f32.mxu0 0.0
    %925 = vmatmul.mubr.f32.gmra.mrb[0].mxu0 %v853
    %v926 = vpop.f32.mrb[0].mxu0
    %v927 = vadd.f32 0.0, %v926
    %v928 = vpop.f32.mrb[0].mxu0
    %929 = vdwg.mxu0
    %v930 = vmax.f32 %v922, 0.0
    %v931 = vmax.f32 %v927, 0.0
    %934 = vrot.lane.b32.xlu0 %v930, 127
    %v935 = vpop.permute.xlu0 %934
    %936 = vrot.lane.b32.xlu0 %v931, 127
    %v937 = vpop.permute.xlu0 %936
    %vm940 = vcmask 56320
    %v941 = vsel %vm940, %v935, 0.0
    %v942 = vsel %vm940, %v937, 0.0
    %v943 = vmax.f32 %v930, %v941
    %v944 = vmax.f32 %v931, %v942
    %v945 = vld [vmem:[%s9] sm:$0xff]
    %v947 = vsel %vm392, %v943, 0
    %v950 = vsel %vm392, %v944, 0
    %952 = vmatprep.subr.mxu0 0.0
    %953 = vmatpush1.msra.mxu0 %v945
    %954 = vmatprep.subr.mxu0 0.0
    %955 = vmatpush1.msra.mxu0 0.0
    %956 = vmatprep.subr.mxu0 0.0
    %957 = vmatpush1.msra.mxu0 0.0
    %958 = vmatprep.subr.mxu0 0.0
    %959 = vmatpush1.msra.mxu0 0.0
    %960 = vmatprep.subr.mxu0 0.0
    %961 = vmatpush1.msra.mxu0 0.0
    %962 = vmatprep.subr.mxu0 0.0
    %963 = vmatpush1.msra.mxu0 0.0
    %964 = vmatprep.subr.mxu0 0.0
    %965 = vmatpush1.msra.mxu0 0.0
    %966 = vmatprep.subr.mxu0 0.0
    %967 = vmatpush1.msra.mxu0 0.0
    %968 = vmatprep.subr.mxu0 0.0
    %969 = vmatpush1.msra.mxu0 0.0
    %970 = vmatprep.subr.mxu0 0.0
    %971 = vmatpush1.msra.mxu0 0.0
    %972 = vmatprep.subr.mxu0 0.0
    %973 = vmatpush1.msra.mxu0 0.0
    %974 = vmatprep.subr.mxu0 0.0
    %975 = vmatpush1.msra.mxu0 0.0
    %976 = vmatprep.subr.mxu0 0.0
    %977 = vmatpush1.msra.mxu0 0.0
    %978 = vmatprep.subr.mxu0 0.0
    %979 = vmatpush1.msra.mxu0 0.0
    %980 = vmatprep.subr.mxu0 0.0
    %981 = vmatpush1.msra.mxu0 0.0
    %982 = vmatprep.subr.mxu0 0.0
    %983 = vmatpush1.msra.mxu0 0.0
    %984 = vmatprep.subr.mxu0 0.0
    %985 = vmatpush1.msra.mxu0 0.0
    %986 = vmatprep.subr.mxu0 0.0
    %987 = vmatpush1.msra.mxu0 0.0
    %988 = vmatprep.subr.mxu0 0.0
    %989 = vmatpush1.msra.mxu0 0.0
    %990 = vmatprep.subr.mxu0 0.0
    %991 = vmatpush1.msra.mxu0 0.0
    %992 = vmatprep.subr.mxu0 0.0
    %993 = vmatpush1.msra.mxu0 0.0
    %994 = vmatprep.subr.mxu0 0.0
    %995 = vmatpush1.msra.mxu0 0.0
    %996 = vmatprep.subr.mxu0 0.0
    %997 = vmatpush1.msra.mxu0 0.0
    %998 = vmatprep.subr.mxu0 0.0
    %999 = vmatpush1.msra.mxu0 0.0
    %1000 = vmatprep.subr.mxu0 0.0
    %1001 = vmatpush1.msra.mxu0 0.0
    %1002 = vmatprep.subr.mxu0 0.0
    %1003 = vmatpush1.msra.mxu0 0.0
    %1004 = vmatprep.subr.mxu0 0.0
    %1005 = vmatpush1.msra.mxu0 0.0
    %1006 = vmatprep.subr.mxu0 0.0
    %1007 = vmatpush1.msra.mxu0 0.0
    %1008 = vmatprep.subr.mxu0 0.0
    %1009 = vmatpush1.msra.mxu0 0.0
    %1010 = vmatprep.subr.mxu0 0.0
    %1011 = vmatpush1.msra.mxu0 0.0
    %1012 = vmatprep.subr.mxu0 0.0
    %1013 = vmatpush1.msra.mxu0 0.0
    %1014 = vmatprep.subr.mxu0 0.0
    %1015 = vmatpush1.msra.mxu0 0.0
    %1016 = vmatprep.mubr.f32.mxu0 0.0
    %1017 = vmatmul.mubr.f32.gmra.mrb[0].mxu0 %v947
    %v1018 = vpop.f32.mrb[0].mxu0
    %v1019 = vadd.f32 0.0, %v1018
    %v1020 = vpop.f32.mrb[0].mxu0
    %1021 = vmatprep.mubr.f32.mxu0 0.0
    %1022 = vmatmul.mubr.f32.gmra.mrb[0].mxu0 %v950
    %v1023 = vpop.f32.mrb[0].mxu0
    %v1024 = vadd.f32 0.0, %v1023
    %v1025 = vpop.f32.mrb[0].mxu0
    %1026 = vdwg.mxu0
    %v1027 = vld [vmem:[%s12] sm:$0xff]
    %v1028 = vld [vmem:[%s12 + $0x8] sm:$0xff]
    %1030 = vset.pattern.permute.xlu0 0
    %1031 = vperm.xlu0 %1030, %v1027
    %v1032 = vpop.permute.xlu0 %1031
    %1035 = vset.pattern.permute.xlu0 0
    %1036 = vperm.xlu0 %1035, %v1028
    %v1037 = vpop.permute.xlu0 %1036
    %v1039 = vmul.f32 %v1019, %v1032
    %v1040 = vmul.f32 %v1024, %v1037
    %1041 = vset.pattern.permute.xlu0 1
    %1042 = vperm.xlu0 %1041, %v1027
    %v1043 = vpop.permute.xlu0 %1042
    %1045 = vset.pattern.permute.xlu0 1
    %1046 = vperm.xlu0 %1045, %v1028
    %v1047 = vpop.permute.xlu0 %1046
    %v1049 = vadd.f32 %v1039, %v1043
    %v1050 = vadd.f32 %v1040, %v1047
    %v1051 = vld [vmem:[%s15] sm:$0xf]
    %v1053 = vsel %vm105, %v1049, 0
    %v1056 = vsel %vm105, %v1050, 0
    %v1059 = vsel %vm109, %v1051, 0
    %1061 = vmatprep.subr.mxu0 0.0
    %1062 = vmatpush1.msra.mxu0 %v1059
    %1063 = vmatprep.subr.mxu0 0.0
    %1064 = vmatpush1.msra.mxu0 0.0
    %1065 = vmatprep.subr.mxu0 0.0
    %1066 = vmatpush1.msra.mxu0 0.0
    %1067 = vmatprep.subr.mxu0 0.0
    %1068 = vmatpush1.msra.mxu0 0.0
    %1069 = vmatprep.subr.mxu0 0.0
    %1070 = vmatpush1.msra.mxu0 0.0
    %1071 = vmatprep.subr.mxu0 0.0
    %1072 = vmatpush1.msra.mxu0 0.0
    %1073 = vmatprep.subr.mxu0 0.0
    %1074 = vmatpush1.msra.mxu0 0.0
    %1075 = vmatprep.subr.mxu0 0.0
    %1076 = vmatpush1.msra.mxu0 0.0
    %1077 = vmatprep.subr.mxu0 0.0
    %1078 = vmatpush1.msra.mxu0 0.0
    %1079 = vmatprep.subr.mxu0 0.0
    %1080 = vmatpush1.msra.mxu0 0.0
    %1081 = vmatprep.subr.mxu0 0.0
    %1082 = vmatpush1.msra.mxu0 0.0
    %1083 = vmatprep.subr.mxu0 0.0
    %1084 = vmatpush1.msra.mxu0 0.0
    %1085 = vmatprep.subr.mxu0 0.0
    %1086 = vmatpush1.msra.mxu0 0.0
    %1087 = vmatprep.subr.mxu0 0.0
    %1088 = vmatpush1.msra.mxu0 0.0
    %1089 = vmatprep.subr.mxu0 0.0
    %1090 = vmatpush1.msra.mxu0 0.0
    %1091 = vmatprep.subr.mxu0 0.0
    %1092 = vmatpush1.msra.mxu0 0.0
    %1093 = vmatprep.subr.mxu0 0.0
    %1094 = vmatpush1.msra.mxu0 0.0
    %1095 = vmatprep.subr.mxu0 0.0
    %1096 = vmatpush1.msra.mxu0 0.0
    %1097 = vmatprep.subr.mxu0 0.0
    %1098 = vmatpush1.msra.mxu0 0.0
    %1099 = vmatprep.subr.mxu0 0.0
    %1100 = vmatpush1.msra.mxu0 0.0
    %1101 = vmatprep.subr.mxu0 0.0
    %1102 = vmatpush1.msra.mxu0 0.0
    %1103 = vmatprep.subr.mxu0 0.0
    %1104 = vmatpush1.msra.mxu0 0.0
    %1105 = vmatprep.subr.mxu0 0.0
    %1106 = vmatpush1.msra.mxu0 0.0
    %1107 = vmatprep.subr.mxu0 0.0
    %1108 = vmatpush1.msra.mxu0 0.0
    %1109 = vmatprep.subr.mxu0 0.0
    %1110 = vmatpush1.msra.mxu0 0.0
    %1111 = vmatprep.subr.mxu0 0.0
    %1112 = vmatpush1.msra.mxu0 0.0
    %1113 = vmatprep.subr.mxu0 0.0
    %1114 = vmatpush1.msra.mxu0 0.0
    %1115 = vmatprep.subr.mxu0 0.0
    %1116 = vmatpush1.msra.mxu0 0.0
    %1117 = vmatprep.subr.mxu0 0.0
    %1118 = vmatpush1.msra.mxu0 0.0
    %1119 = vmatprep.subr.mxu0 0.0
    %1120 = vmatpush1.msra.mxu0 0.0
    %1121 = vmatprep.subr.mxu0 0.0
    %1122 = vmatpush1.msra.mxu0 0.0
    %1123 = vmatprep.subr.mxu0 0.0
    %1124 = vmatpush1.msra.mxu0 0.0
    %1125 = vmatprep.mubr.f32.mxu0 0.0
    %1126 = vmatmul.mubr.f32.gmra.mrb[0].mxu0 %v1053
    %v1127 = vpop.f32.mrb[0].mxu0
    %v1128 = vadd.f32 0.0, %v1127
    %v1129 = vpop.f32.mrb[0].mxu0
    %1130 = vmatprep.mubr.f32.mxu0 0.0
    %1131 = vmatmul.mubr.f32.gmra.mrb[0].mxu0 %v1056
    %v1132 = vpop.f32.mrb[0].mxu0
    %v1133 = vadd.f32 0.0, %v1132
    %v1134 = vpop.f32.mrb[0].mxu0
    %1135 = vdwg.mxu0
    %v1136 = vld [vmem:[%s13] sm:$0xff]
    %v1137 = vld [vmem:[%s13 + $0x8] sm:$0xff]
    %v1138 = vld [vmem:[%s13 + $0x10] sm:$0xff]
    %v1139 = vld [vmem:[%s13 + $0x18] sm:$0xff]
    %s1140 = scalar_lea.vmem %s15, 4
    %v1141 = vld [vmem:[%s1140] sm:$0xf]
    %v1143 = vsel %vm109, %v1141, 0
    %1145 = vmatprep.subr.mxu0 0.0
    %1146 = vmatpush1.msra.mxu0 %v1143
    %1147 = vmatprep.subr.mxu0 0.0
    %1148 = vmatpush1.msra.mxu0 0.0
    %1149 = vmatprep.subr.mxu0 0.0
    %1150 = vmatpush1.msra.mxu0 0.0
    %1151 = vmatprep.subr.mxu0 0.0
    %1152 = vmatpush1.msra.mxu0 0.0
    %1153 = vmatprep.subr.mxu0 0.0
    %1154 = vmatpush1.msra.mxu0 0.0
    %1155 = vmatprep.subr.mxu0 0.0
    %1156 = vmatpush1.msra.mxu0 0.0
    %1157 = vmatprep.subr.mxu0 0.0
    %1158 = vmatpush1.msra.mxu0 0.0
    %1159 = vmatprep.subr.mxu0 0.0
    %1160 = vmatpush1.msra.mxu0 0.0
    %1161 = vmatprep.subr.mxu0 0.0
    %1162 = vmatpush1.msra.mxu0 0.0
    %1163 = vmatprep.subr.mxu0 0.0
    %1164 = vmatpush1.msra.mxu0 0.0
    %1165 = vmatprep.subr.mxu0 0.0
    %1166 = vmatpush1.msra.mxu0 0.0
    %1167 = vmatprep.subr.mxu0 0.0
    %1168 = vmatpush1.msra.mxu0 0.0
    %1169 = vmatprep.subr.mxu0 0.0
    %1170 = vmatpush1.msra.mxu0 0.0
    %1171 = vmatprep.subr.mxu0 0.0
    %1172 = vmatpush1.msra.mxu0 0.0
    %1173 = vmatprep.subr.mxu0 0.0
    %1174 = vmatpush1.msra.mxu0 0.0
    %1175 = vmatprep.subr.mxu0 0.0
    %1176 = vmatpush1.msra.mxu0 0.0
    %1177 = vmatprep.subr.mxu0 0.0
    %1178 = vmatpush1.msra.mxu0 0.0
    %1179 = vmatprep.subr.mxu0 0.0
    %1180 = vmatpush1.msra.mxu0 0.0
    %1181 = vmatprep.subr.mxu0 0.0
    %1182 = vmatpush1.msra.mxu0 0.0
    %1183 = vmatprep.subr.mxu0 0.0
    %1184 = vmatpush1.msra.mxu0 0.0
    %1185 = vmatprep.subr.mxu0 0.0
    %1186 = vmatpush1.msra.mxu0 0.0
    %1187 = vmatprep.subr.mxu0 0.0
    %1188 = vmatpush1.msra.mxu0 0.0
    %1189 = vmatprep.subr.mxu0 0.0
    %1190 = vmatpush1.msra.mxu0 0.0
    %1191 = vmatprep.subr.mxu0 0.0
    %1192 = vmatpush1.msra.mxu0 0.0
    %1193 = vmatprep.subr.mxu0 0.0
    %1194 = vmatpush1.msra.mxu0 0.0
    %1195 = vmatprep.subr.mxu0 0.0
    %1196 = vmatpush1.msra.mxu0 0.0
    %1197 = vmatprep.subr.mxu0 0.0
    %1198 = vmatpush1.msra.mxu0 0.0
    %1199 = vmatprep.subr.mxu0 0.0
    %1200 = vmatpush1.msra.mxu0 0.0
    %1201 = vmatprep.subr.mxu0 0.0
    %1202 = vmatpush1.msra.mxu0 0.0
    %1203 = vmatprep.subr.mxu0 0.0
    %1204 = vmatpush1.msra.mxu0 0.0
    %1205 = vmatprep.subr.mxu0 0.0
    %1206 = vmatpush1.msra.mxu0 0.0
    %1207 = vmatprep.subr.mxu0 0.0
    %1208 = vmatpush1.msra.mxu0 0.0
    %1209 = vmatprep.mubr.f32.mxu0 0.0
    %1210 = vmatmul.mubr.f32.gmra.mrb[0].mxu0 %v1053
    %v1211 = vpop.f32.mrb[0].mxu0
    %v1212 = vadd.f32 0.0, %v1211
    %v1213 = vpop.f32.mrb[0].mxu0
    %1214 = vmatprep.mubr.f32.mxu0 0.0
    %1215 = vmatmul.mubr.f32.gmra.mrb[0].mxu0 %v1056
    %v1216 = vpop.f32.mrb[0].mxu0
    %v1217 = vadd.f32 0.0, %v1216
    %v1218 = vpop.f32.mrb[0].mxu0
    %1219 = vdwg.mxu0
    %s1220 = scalar_lea.vmem %s13, 32
    %v1221 = vld [vmem:[%s1220] sm:$0xff]
    %v1222 = vld [vmem:[%s1220 + $0x8] sm:$0xff]
    %v1223 = vld [vmem:[%s1220 + $0x10] sm:$0xff]
    %v1224 = vld [vmem:[%s1220 + $0x18] sm:$0xff]
    %1225 = vxpose.xlu0.b32.start [1/16] %v1212, 128
    %1226 = vxpose.xlu0.b32.cont [2/16] %v1217, 128
    %1227 = vxpose.xlu0.b32.cont [3/16] 0.0, 128
    %1228 = vxpose.xlu0.b32.cont [4/16] 0.0, 128
    %1229 = vxpose.xlu0.b32.cont [5/16] 0.0, 128
    %1230 = vxpose.xlu0.b32.cont [6/16] 0.0, 128
    %1231 = vxpose.xlu0.b32.cont [7/16] 0.0, 128
    %1232 = vxpose.xlu0.b32.cont [8/16] 0.0, 128
    %1233 = vxpose.xlu0.b32.cont [9/16] 0.0, 128
    %1234 = vxpose.xlu0.b32.cont [10/16] 0.0, 128
    %1235 = vxpose.xlu0.b32.cont [11/16] 0.0, 128
    %1236 = vxpose.xlu0.b32.cont [12/16] 0.0, 128
    %1237 = vxpose.xlu0.b32.cont [13/16] 0.0, 128
    %1238 = vxpose.xlu0.b32.cont [14/16] 0.0, 128
    %1239 = vxpose.xlu0.b32.cont [15/16] 0.0, 128
    %1240 = vxpose.xlu0.b32.end [16/16] 0.0, 128
    %v1241 = vpop.trf.xlu0
    %v1242 = vpop.trf.xlu0
    %v1243 = vpop.trf.xlu0
    %v1244 = vpop.trf.xlu0
    %v1245 = vpop.trf.xlu0
    %v1246 = vpop.trf.xlu0
    %v1247 = vpop.trf.xlu0
    %v1248 = vpop.trf.xlu0
    %v1249 = vpop.trf.xlu0
    %v1250 = vpop.trf.xlu0
    %v1251 = vpop.trf.xlu0
    %v1252 = vpop.trf.xlu0
    %v1253 = vpop.trf.xlu0
    %v1254 = vpop.trf.xlu0
    %v1255 = vpop.trf.xlu0
    %v1256 = vpop.trf.xlu0
    %v1258 = vsel %vm65, %v1241, 0
    %1260 = vmatprep.subr.mxu0 %v1222
    %1261 = vmatpush1.msra.mxu0 %v1221
    %1262 = vmatprep.subr.mxu0 %v1224
    %1263 = vmatpush1.msra.mxu0 %v1223
    %1264 = vmatprep.subr.mxu0 0.0
    %1265 = vmatpush1.msra.mxu0 0.0
    %1266 = vmatprep.subr.mxu0 0.0
    %1267 = vmatpush1.msra.mxu0 0.0
    %1268 = vmatprep.subr.mxu0 0.0
    %1269 = vmatpush1.msra.mxu0 0.0
    %1270 = vmatprep.subr.mxu0 0.0
    %1271 = vmatpush1.msra.mxu0 0.0
    %1272 = vmatprep.subr.mxu0 0.0
    %1273 = vmatpush1.msra.mxu0 0.0
    %1274 = vmatprep.subr.mxu0 0.0
    %1275 = vmatpush1.msra.mxu0 0.0
    %1276 = vmatprep.subr.mxu0 0.0
    %1277 = vmatpush1.msra.mxu0 0.0
    %1278 = vmatprep.subr.mxu0 0.0
    %1279 = vmatpush1.msra.mxu0 0.0
    %1280 = vmatprep.subr.mxu0 0.0
    %1281 = vmatpush1.msra.mxu0 0.0
    %1282 = vmatprep.subr.mxu0 0.0
    %1283 = vmatpush1.msra.mxu0 0.0
    %1284 = vmatprep.subr.mxu0 0.0
    %1285 = vmatpush1.msra.mxu0 0.0
    %1286 = vmatprep.subr.mxu0 0.0
    %1287 = vmatpush1.msra.mxu0 0.0
    %1288 = vmatprep.subr.mxu0 0.0
    %1289 = vmatpush1.msra.mxu0 0.0
    %1290 = vmatprep.subr.mxu0 0.0
    %1291 = vmatpush1.msra.mxu0 0.0
    %1292 = vmatprep.subr.mxu0 0.0
    %1293 = vmatpush1.msra.mxu0 0.0
    %1294 = vmatprep.subr.mxu0 0.0
    %1295 = vmatpush1.msra.mxu0 0.0
    %1296 = vmatprep.subr.mxu0 0.0
    %1297 = vmatpush1.msra.mxu0 0.0
    %1298 = vmatprep.subr.mxu0 0.0
    %1299 = vmatpush1.msra.mxu0 0.0
    %1300 = vmatprep.subr.mxu0 0.0
    %1301 = vmatpush1.msra.mxu0 0.0
    %1302 = vmatprep.subr.mxu0 0.0
    %1303 = vmatpush1.msra.mxu0 0.0
    %1304 = vmatprep.subr.mxu0 0.0
    %1305 = vmatpush1.msra.mxu0 0.0
    %1306 = vmatprep.subr.mxu0 0.0
    %1307 = vmatpush1.msra.mxu0 0.0
    %1308 = vmatprep.subr.mxu0 0.0
    %1309 = vmatpush1.msra.mxu0 0.0
    %1310 = vmatprep.subr.mxu0 0.0
    %1311 = vmatpush1.msra.mxu0 0.0
    %1312 = vmatprep.subr.mxu0 0.0
    %1313 = vmatpush1.msra.mxu0 0.0
    %1314 = vmatprep.subr.mxu0 0.0
    %1315 = vmatpush1.msra.mxu0 0.0
    %1316 = vmatprep.subr.mxu0 0.0
    %1317 = vmatpush1.msra.mxu0 0.0
    %1318 = vmatprep.subr.mxu0 0.0
    %1319 = vmatpush1.msra.mxu0 0.0
    %1320 = vmatprep.subr.mxu0 0.0
    %1321 = vmatpush1.msra.mxu0 0.0
    %1322 = vmatprep.subr.mxu0 0.0
    %1323 = vmatpush1.msra.mxu0 0.0
    %1324 = vmatprep.mubr.f32.mxu0 0.0
    %1325 = vmatmul.mubr.f32.gmra.mrb[0].mxu0 %v1258
    %v1326 = vpop.f32.mrb[0].mxu0
    %v1327 = vadd.f32 0.0, %v1326
    %v1328 = vpop.f32.mrb[0].mxu0
    %v1329 = vadd.f32 0.0, %v1328
    %1330 = vdwg.mxu0
    %1331 = vxpose.xlu0.b32.start [1/16] %v1128, 128
    %1332 = vxpose.xlu0.b32.cont [2/16] %v1133, 128
    %1333 = vxpose.xlu0.b32.cont [3/16] 0.0, 128
    %1334 = vxpose.xlu0.b32.cont [4/16] 0.0, 128
    %1335 = vxpose.xlu0.b32.cont [5/16] 0.0, 128
    %1336 = vxpose.xlu0.b32.cont [6/16] 0.0, 128
    %1337 = vxpose.xlu0.b32.cont [7/16] 0.0, 128
    %1338 = vxpose.xlu0.b32.cont [8/16] 0.0, 128
    %1339 = vxpose.xlu0.b32.cont [9/16] 0.0, 128
    %1340 = vxpose.xlu0.b32.cont [10/16] 0.0, 128
    %1341 = vxpose.xlu0.b32.cont [11/16] 0.0, 128
    %1342 = vxpose.xlu0.b32.cont [12/16] 0.0, 128
    %1343 = vxpose.xlu0.b32.cont [13/16] 0.0, 128
    %1344 = vxpose.xlu0.b32.cont [14/16] 0.0, 128
    %1345 = vxpose.xlu0.b32.cont [15/16] 0.0, 128
    %1346 = vxpose.xlu0.b32.end [16/16] 0.0, 128
    %v1347 = vpop.trf.xlu0
    %v1348 = vpop.trf.xlu0
    %v1349 = vpop.trf.xlu0
    %v1350 = vpop.trf.xlu0
    %v1351 = vpop.trf.xlu0
    %v1352 = vpop.trf.xlu0
    %v1353 = vpop.trf.xlu0
    %v1354 = vpop.trf.xlu0
    %v1355 = vpop.trf.xlu0
    %v1356 = vpop.trf.xlu0
    %v1357 = vpop.trf.xlu0
    %v1358 = vpop.trf.xlu0
    %v1359 = vpop.trf.xlu0
    %v1360 = vpop.trf.xlu0
    %v1361 = vpop.trf.xlu0
    %v1362 = vpop.trf.xlu0
    %v1364 = vsel %vm65, %v1347, 0
    %1366 = vmatprep.subr.mxu0 %v1137
    %1367 = vmatpush1.msra.mxu0 %v1136
    %1368 = vmatprep.subr.mxu0 %v1139
    %1369 = vmatpush1.msra.mxu0 %v1138
    %1370 = vmatprep.subr.mxu0 0.0
    %1371 = vmatpush1.msra.mxu0 0.0
    %1372 = vmatprep.subr.mxu0 0.0
    %1373 = vmatpush1.msra.mxu0 0.0
    %1374 = vmatprep.subr.mxu0 0.0
    %1375 = vmatpush1.msra.mxu0 0.0
    %1376 = vmatprep.subr.mxu0 0.0
    %1377 = vmatpush1.msra.mxu0 0.0
    %1378 = vmatprep.subr.mxu0 0.0
    %1379 = vmatpush1.msra.mxu0 0.0
    %1380 = vmatprep.subr.mxu0 0.0
    %1381 = vmatpush1.msra.mxu0 0.0
    %1382 = vmatprep.subr.mxu0 0.0
    %1383 = vmatpush1.msra.mxu0 0.0
    %1384 = vmatprep.subr.mxu0 0.0
    %1385 = vmatpush1.msra.mxu0 0.0
    %1386 = vmatprep.subr.mxu0 0.0
    %1387 = vmatpush1.msra.mxu0 0.0
    %1388 = vmatprep.subr.mxu0 0.0
    %1389 = vmatpush1.msra.mxu0 0.0
    %1390 = vmatprep.subr.mxu0 0.0
    %1391 = vmatpush1.msra.mxu0 0.0
    %1392 = vmatprep.subr.mxu0 0.0
    %1393 = vmatpush1.msra.mxu0 0.0
    %1394 = vmatprep.subr.mxu0 0.0
    %1395 = vmatpush1.msra.mxu0 0.0
    %1396 = vmatprep.subr.mxu0 0.0
    %1397 = vmatpush1.msra.mxu0 0.0
    %1398 = vmatprep.subr.mxu0 0.0
    %1399 = vmatpush1.msra.mxu0 0.0
    %1400 = vmatprep.subr.mxu0 0.0
    %1401 = vmatpush1.msra.mxu0 0.0
    %1402 = vmatprep.subr.mxu0 0.0
    %1403 = vmatpush1.msra.mxu0 0.0
    %1404 = vmatprep.subr.mxu0 0.0
    %1405 = vmatpush1.msra.mxu0 0.0
    %1406 = vmatprep.subr.mxu0 0.0
    %1407 = vmatpush1.msra.mxu0 0.0
    %1408 = vmatprep.subr.mxu0 0.0
    %1409 = vmatpush1.msra.mxu0 0.0
    %1410 = vmatprep.subr.mxu0 0.0
    %1411 = vmatpush1.msra.mxu0 0.0
    %1412 = vmatprep.subr.mxu0 0.0
    %1413 = vmatpush1.msra.mxu0 0.0
    %1414 = vmatprep.subr.mxu0 0.0
    %1415 = vmatpush1.msra.mxu0 0.0
    %1416 = vmatprep.subr.mxu0 0.0
    %1417 = vmatpush1.msra.mxu0 0.0
    %1418 = vmatprep.subr.mxu0 0.0
    %1419 = vmatpush1.msra.mxu0 0.0
    %1420 = vmatprep.subr.mxu0 0.0
    %1421 = vmatpush1.msra.mxu0 0.0
    %1422 = vmatprep.subr.mxu0 0.0
    %1423 = vmatpush1.msra.mxu0 0.0
    %1424 = vmatprep.subr.mxu0 0.0
    %1425 = vmatpush1.msra.mxu0 0.0
    %1426 = vmatprep.subr.mxu0 0.0
    %1427 = vmatpush1.msra.mxu0 0.0
    %1428 = vmatprep.subr.mxu0 0.0
    %1429 = vmatpush1.msra.mxu0 0.0
    %1430 = vmatprep.mubr.f32.mxu0 0.0
    %1431 = vmatmul.mubr.f32.gmra.mrb[0].mxu0 %v1364
    %v1432 = vpop.f32.mrb[0].mxu0
    %v1433 = vadd.f32 %v1327, %v1432
    %v1434 = vpop.f32.mrb[0].mxu0
    %v1435 = vadd.f32 %v1329, %v1434
    %1436 = vdwg.mxu0
    %v1437 = vld [vmem:[%s14] sm:$0x3]
    %v1439 = vlaneseq
    %v1440 = vshrl.u32 %v1439, 7
    %v1441 = vsub.s32 0, %v1440
    %v1442 = vrot.slane %v1437, %v1441
    %v1443 = vlaneseq
    %v1444 = vshrl.u32 %v1443, 7
    %v1445 = vsub.s32 1, %v1444
    %v1446 = vrot.slane %v1437, %v1445
    %v1449 = vadd.f32 %v1433, %v1442
    %v1450 = vadd.f32 %v1435, %v1446
    %v1451 = vmax.f32 %v1449, 0.0
    %v1452 = vmax.f32 %v1450, 0.0
    %v1453 = vld [vmem:[%s16] sm:$0xff]
    %v1454 = vld [vmem:[%s16 + $0x8] sm:$0xff]
    %v1455 = vld [vmem:[%s16 + $0x10] sm:$0xff]
    %v1456 = vld [vmem:[%s16 + $0x18] sm:$0xff]
    %v1457 = vld [vmem:[%s16 + $0x20] sm:$0xff]
    %v1458 = vld [vmem:[%s16 + $0x28] sm:$0xff]
    %v1459 = vld [vmem:[%s16 + $0x30] sm:$0xff]
    %v1460 = vld [vmem:[%s16 + $0x38] sm:$0xff]
    %v1461 = vld [vmem:[%s16 + $0x40] sm:$0xff]
    %v1462 = vld [vmem:[%s16 + $0x48] sm:$0xff]
    %v1463 = vld [vmem:[%s16 + $0x50] sm:$0xff]
    %v1464 = vld [vmem:[%s16 + $0x58] sm:$0xff]
    %v1465 = vld [vmem:[%s16 + $0x60] sm:$0xff]
    %v1466 = vld [vmem:[%s16 + $0x68] sm:$0xff]
    %v1467 = vld [vmem:[%s16 + $0x70] sm:$0xff]
    %v1468 = vld [vmem:[%s16 + $0x78] sm:$0xff]
    %v1469 = vld [vmem:[%s16 + $0x80] sm:$0xff]
    %v1470 = vld [vmem:[%s16 + $0x88] sm:$0xff]
    %v1471 = vld [vmem:[%s16 + $0x90] sm:$0xff]
    %v1472 = vld [vmem:[%s16 + $0x98] sm:$0xff]
    %v1473 = vld [vmem:[%s16 + $0xa0] sm:$0xff]
    %v1474 = vld [vmem:[%s16 + $0xa8] sm:$0xff]
    %v1475 = vld [vmem:[%s16 + $0xb0] sm:$0xff]
    %v1476 = vld [vmem:[%s16 + $0xb8] sm:$0xff]
    %v1477 = vld [vmem:[%s16 + $0xc0] sm:$0xff]
    %v1478 = vld [vmem:[%s16 + $0xc8] sm:$0xff]
    %v1479 = vld [vmem:[%s16 + $0xd0] sm:$0xff]
    %v1480 = vld [vmem:[%s16 + $0xd8] sm:$0xff]
    %v1481 = vld [vmem:[%s16 + $0xe0] sm:$0xff]
    %v1482 = vld [vmem:[%s16 + $0xe8] sm:$0xff]
    %v1483 = vld [vmem:[%s16 + $0xf0] sm:$0xff]
    %v1484 = vld [vmem:[%s16 + $0xf8] sm:$0xff]
    %v1485 = vld [vmem:[%s17] sm:$0x1]
    %v1487 = vlaneseq
    %v1488 = vshrl.u32 %v1487, 7
    %v1489 = vsub.s32 0, %v1488
    %v1490 = vrot.slane %v1485, %v1489
    %1492 = vmatprep.subr.mxu0 0.0
    %1493 = vmatpush1.msra.mxu0 %v1453
    %1494 = vmatprep.subr.mxu0 0.0
    %1495 = vmatpush1.msra.mxu0 %v1454
    %1496 = vmatprep.subr.mxu0 0.0
    %1497 = vmatpush1.msra.mxu0 %v1455
    %1498 = vmatprep.subr.mxu0 0.0
    %1499 = vmatpush1.msra.mxu0 %v1456
    %1500 = vmatprep.subr.mxu0 0.0
    %1501 = vmatpush1.msra.mxu0 %v1457
    %1502 = vmatprep.subr.mxu0 0.0
    %1503 = vmatpush1.msra.mxu0 %v1458
    %1504 = vmatprep.subr.mxu0 0.0
    %1505 = vmatpush1.msra.mxu0 %v1459
    %1506 = vmatprep.subr.mxu0 0.0
    %1507 = vmatpush1.msra.mxu0 %v1460
    %1508 = vmatprep.subr.mxu0 0.0
    %1509 = vmatpush1.msra.mxu0 %v1461
    %1510 = vmatprep.subr.mxu0 0.0
    %1511 = vmatpush1.msra.mxu0 %v1462
    %1512 = vmatprep.subr.mxu0 0.0
    %1513 = vmatpush1.msra.mxu0 %v1463
    %1514 = vmatprep.subr.mxu0 0.0
    %1515 = vmatpush1.msra.mxu0 %v1464
    %1516 = vmatprep.subr.mxu0 0.0
    %1517 = vmatpush1.msra.mxu0 %v1465
    %1518 = vmatprep.subr.mxu0 0.0
    %1519 = vmatpush1.msra.mxu0 %v1466
    %1520 = vmatprep.subr.mxu0 0.0
    %1521 = vmatpush1.msra.mxu0 %v1467
    %1522 = vmatprep.subr.mxu0 0.0
    %1523 = vmatpush1.msra.mxu0 %v1468
    %1524 = vmatprep.subr.mxu0 0.0
    %1525 = vmatpush1.msra.mxu0 %v1469
    %1526 = vmatprep.subr.mxu0 0.0
    %1527 = vmatpush1.msra.mxu0 %v1470
    %1528 = vmatprep.subr.mxu0 0.0
    %1529 = vmatpush1.msra.mxu0 %v1471
    %1530 = vmatprep.subr.mxu0 0.0
    %1531 = vmatpush1.msra.mxu0 %v1472
    %1532 = vmatprep.subr.mxu0 0.0
    %1533 = vmatpush1.msra.mxu0 %v1473
    %1534 = vmatprep.subr.mxu0 0.0
    %1535 = vmatpush1.msra.mxu0 %v1474
    %1536 = vmatprep.subr.mxu0 0.0
    %1537 = vmatpush1.msra.mxu0 %v1475
    %1538 = vmatprep.subr.mxu0 0.0
    %1539 = vmatpush1.msra.mxu0 %v1476
    %1540 = vmatprep.subr.mxu0 0.0
    %1541 = vmatpush1.msra.mxu0 %v1477
    %1542 = vmatprep.subr.mxu0 0.0
    %1543 = vmatpush1.msra.mxu0 %v1478
    %1544 = vmatprep.subr.mxu0 0.0
    %1545 = vmatpush1.msra.mxu0 %v1479
    %1546 = vmatprep.subr.mxu0 0.0
    %1547 = vmatpush1.msra.mxu0 %v1480
    %1548 = vmatprep.subr.mxu0 0.0
    %1549 = vmatpush1.msra.mxu0 %v1481
    %1550 = vmatprep.subr.mxu0 0.0
    %1551 = vmatpush1.msra.mxu0 %v1482
    %1552 = vmatprep.subr.mxu0 0.0
    %1553 = vmatpush1.msra.mxu0 %v1483
    %1554 = vmatprep.subr.mxu0 0.0
    %1555 = vmatpush1.msra.mxu0 %v1484
    %1556 = vmatprep.mubr.f32.mxu0 %v1452
    %1557 = vmatmul.mubr.f32.gmra.mrb[0].mxu0 %v1451
    %v1558 = vpop.f32.mrb[0].mxu0
    %v1559 = vadd.f32 %v1490, %v1558
    %v1560 = vpop.f32.mrb[0].mxu0
    %1561 = vdwg.mxu0
    %vm1562 = vcmask 58368
    %1563 = vst.msk [vmem:[#allocation2] sm:$0x3] %vm1562, %v1559
    // Predicated region
    $region74: #{tpu_custom_call.1} parent=1 // pred_check
      _
    $region75: #{tpu_custom_call.1} parent=1 // pred_check_branch
      %1565 = sbr.rel (0) target = $region77
    $region76: #{tpu_custom_call.1} parent=1 // pred_region
      %s1567 = ssub.s32 32, 32
      %1568 = vsyncadd [#allocation3], %s1567
      %s1570 = sshll.u32 [#allocation2], 4
      %s1571 = int_to_ptr.vmem [resolvable:$true] %s1570
      %1573 = dma.vmem_to_hbm [thread:$0]  %s1571, 32, %s18, [#allocation3]
    $region77: #{tpu_custom_call.1} parent=1 // pred_fallthru
      _
    // Predicated region
    $region78: #{tpu_custom_call.1} parent=1 // pred_check
      _
    $region79: #{tpu_custom_call.1} parent=1 // pred_check_branch
      %1575 = sbr.rel (0) target = $region81
    $region80: #{tpu_custom_call.1} parent=1 // pred_region
      %1576 = dma.done [#allocation3], 32
    $region81: #{tpu_custom_call.1} parent=1 // pred_fallthru
      _
    %1577 = vsyncpa [#allocation3], 1

</llo_original>
